<compile_context>
chip_gen: v7x
topology: tpu7x:2x2x1
jax: 0.10.0
libtpu: 0.0.40
codegen_flags: <defaults>
</compile_context>

<pallas_src>
import functools
import math

import jax
import jax.numpy as jnp
from jax import lax
from jax.experimental import pallas as pl
from jax.experimental.pallas import tpu as pltpu


_COLS = 1024           # lane-dense last dim (multiple of 128)
_MAX_BLOCK_ROWS = 256  # 256 x 1024 x f32 = 1 MiB per block


def _mix32(x):
    """lowbias32 integer finalizer: uint32 -> well-mixed uint32."""
    x = x ^ (x >> 16)
    x = x * jnp.uint32(0x7FEB352D)
    x = x ^ (x >> 15)
    x = x * jnp.uint32(0x846CA68B)
    x = x ^ (x >> 16)
    return x


def _gaussian_noise_kernel(seed_ref, x_ref, o_ref, *, mean, std, block_rows, cols):
    half = block_rows // 2

    # One 32-bit hash per *pair* of output elements, keyed by the global pair
    # index so every grid step gets independent bits.
    seed = seed_ref[0].astype(jnp.uint32)
    base_row = (pl.program_id(0) * half).astype(jnp.uint32)
    row = lax.broadcasted_iota(jnp.int32, (half, cols), 0).astype(jnp.uint32)
    col = lax.broadcasted_iota(jnp.int32, (half, cols), 1).astype(jnp.uint32)
    pair_idx = (base_row + row) * jnp.uint32(cols) + col

    bits = _mix32(pair_idx ^ seed)

    # Two 16-bit uniforms per hash (plenty of resolution for augmentation noise).
    hi = (bits >> 16).astype(jnp.int32)                 # values in [0, 65536)
    lo = (bits & jnp.uint32(0xFFFF)).astype(jnp.int32)  # values in [0, 65536)
    u1 = (hi.astype(jnp.float32) + 1.0) * (1.0 / 65536.0)   # (0, 1]  -> log-safe
    u2 = lo.astype(jnp.float32) * (1.0 / 65536.0)            # [0, 1)

    # Box-Muller; use BOTH outputs (halves log/sqrt work per element).
    r = jnp.sqrt(-2.0 * jnp.log(u1))
    theta = jnp.float32(2.0 * math.pi) * u2
    z0 = r * jnp.cos(theta)
    z1 = r * jnp.sin(theta)
    z = jnp.concatenate([z0, z1], axis=0)               # (block_rows, cols)

    noise = z * jnp.float32(std) + jnp.float32(mean)
    o_ref[...] = (x_ref[...].astype(jnp.float32) + noise).astype(o_ref.dtype)


def gaussian_noise(img, seed, *, mean=0.0, std=1.0):
    """img: any-shaped float array (e.g. NCHW). Returns img + N(mean, std^2) noise."""
    orig_shape = img.shape
    flat = img.reshape(-1)
    total = flat.size

    cols = _COLS
    needed_rows = -(-total // cols)
    block_rows = min(_MAX_BLOCK_ROWS, ((needed_rows + 7) // 8) * 8)
    block_elems = block_rows * cols
    padded_total = ((total + block_elems - 1) // block_elems) * block_elems
    if padded_total != total:
        flat = jnp.pad(flat, (0, padded_total - total))
    rows = padded_total // cols
    x2d = flat.reshape(rows, cols)
    grid = (rows // block_rows,)

    # TODO(synk): pass mean/std as SMEM scalars if they must vary at runtime
    # without a recompile; here they are compile-time constants like the module's.
    out2d = pl.pallas_call(
        functools.partial(
            _gaussian_noise_kernel,
            mean=float(mean), std=float(std),
            block_rows=block_rows, cols=cols,
        ),
        out_shape=jax.ShapeDtypeStruct(x2d.shape, x2d.dtype),
        grid=grid,
        in_specs=[
            pl.BlockSpec(memory_space=pltpu.SMEM),               # seed scalar
            pl.BlockSpec((block_rows, cols), lambda i: (i, 0)),  # input tile
        ],
        out_specs=pl.BlockSpec((block_rows, cols), lambda i: (i, 0)),
        compiler_params=pltpu.CompilerParams(
            dimension_semantics=("parallel",),
        ),
    )(jnp.asarray([seed], dtype=jnp.int32), x2d)

    return out2d.reshape(-1)[:total].reshape(orig_shape)


if __name__ == "__main__":
    key = jax.random.PRNGKey(0)
    # Small NCHW input consistent with an image tensor: batch=2, channels=4, 16x16.
    img = jax.random.normal(key, (2, 4, 16, 16), dtype=jnp.float32)

    out = gaussian_noise(img, seed=1234, mean=0.0, std=1.0)
    out = jax.block_until_ready(out)

    # Sanity: shape/dtype preserved; diff == generated noise ~ N(0, 1).
    assert out.shape == img.shape
    assert out.dtype == img.dtype
    diff = out - img
    assert bool(jnp.all(jnp.isfinite(diff)))
    d_std = float(jnp.std(diff))
    d_mean = float(jnp.mean(diff))
    assert 0.7 < d_std < 1.3, d_std
    assert abs(d_mean) < 0.25, d_mean

    print("KERNEL_OK")
</pallas_src>

<mosaic_0001>
module attributes {stable_mosaic.version = 11 : i64} {
  func.func @_gaussian_noise_kernel(%arg0: i32, %arg1: memref<1xi32, #tpu.memory_space<smem>>, %arg2: memref<8x1024xf32, #tpu.memory_space<vmem>>, %arg3: memref<8x1024xf32, #tpu.memory_space<vmem>>) attributes {dimension_semantics = [#tpu.dimension_semantics<parallel>], iteration_bounds = array<i64: 1>, scalar_prefetch = 0 : i64, scratch_operands = 0 : i64, tpu.core_type = #tpu.core_type<tc>, window_params = [{transform_indices = @transform_0, window_bounds = array<i64: 1>}, {transform_indices = @transform_1, window_bounds = array<i64: 8, 1024>}, {transform_indices = @transform_2, window_bounds = array<i64: 8, 1024>}]} {
    %c0 = arith.constant 0 : index
    %0 = memref.load %arg1[%c0] : memref<1xi32, #tpu.memory_space<smem>>
    %c4_i32 = arith.constant 4 : i32
    %1 = arith.muli %arg0, %c4_i32 : i32
    %2 = tpu.iota {dimensions = array<i32: 0>} : vector<4x1024xi32>
    %3 = tpu.iota {dimensions = array<i32: 1>} : vector<4x1024xi32>
    %4 = vector.broadcast %1 : i32 to vector<4x1024xi32>
    %5 = arith.addi %4, %2 : vector<4x1024xi32>
    %c1024_i32 = arith.constant 1024 : i32
    %6 = vector.broadcast %c1024_i32 : i32 to vector<4x1024xi32>
    %7 = arith.muli %5, %6 : vector<4x1024xi32>
    %8 = arith.addi %7, %3 : vector<4x1024xi32>
    %9 = vector.broadcast %0 : i32 to vector<4x1024xi32>
    %10 = arith.xori %8, %9 : vector<4x1024xi32>
    %c16_i32 = arith.constant 16 : i32
    %11 = vector.broadcast %c16_i32 : i32 to vector<4x1024xi32>
    %12 = arith.shrui %10, %11 : vector<4x1024xi32>
    %13 = arith.xori %10, %12 : vector<4x1024xi32>
    %c2146121005_i32 = arith.constant 2146121005 : i32
    %14 = vector.broadcast %c2146121005_i32 : i32 to vector<4x1024xi32>
    %15 = arith.muli %13, %14 : vector<4x1024xi32>
    %c15_i32 = arith.constant 15 : i32
    %16 = vector.broadcast %c15_i32 : i32 to vector<4x1024xi32>
    %17 = arith.shrui %15, %16 : vector<4x1024xi32>
    %18 = arith.xori %15, %17 : vector<4x1024xi32>
    %c-2073254261_i32 = arith.constant -2073254261 : i32
    %19 = vector.broadcast %c-2073254261_i32 : i32 to vector<4x1024xi32>
    %20 = arith.muli %18, %19 : vector<4x1024xi32>
    %c16_i32_0 = arith.constant 16 : i32
    %21 = vector.broadcast %c16_i32_0 : i32 to vector<4x1024xi32>
    %22 = arith.shrui %20, %21 : vector<4x1024xi32>
    %23 = arith.xori %20, %22 : vector<4x1024xi32>
    %c16_i32_1 = arith.constant 16 : i32
    %24 = vector.broadcast %c16_i32_1 : i32 to vector<4x1024xi32>
    %25 = arith.shrui %23, %24 : vector<4x1024xi32>
    %c65535_i32 = arith.constant 65535 : i32
    %26 = vector.broadcast %c65535_i32 : i32 to vector<4x1024xi32>
    %27 = arith.andi %23, %26 : vector<4x1024xi32>
    %28 = arith.sitofp %25 : vector<4x1024xi32> to vector<4x1024xf32>
    %cst = arith.constant 1.000000e+00 : f32
    %29 = vector.broadcast %cst : f32 to vector<4x1024xf32>
    %30 = arith.addf %28, %29 : vector<4x1024xf32>
    %cst_2 = arith.constant 1.52587891E-5 : f32
    %31 = vector.broadcast %cst_2 : f32 to vector<4x1024xf32>
    %32 = arith.mulf %30, %31 : vector<4x1024xf32>
    %33 = arith.sitofp %27 : vector<4x1024xi32> to vector<4x1024xf32>
    %cst_3 = arith.constant 1.52587891E-5 : f32
    %34 = vector.broadcast %cst_3 : f32 to vector<4x1024xf32>
    %35 = arith.mulf %33, %34 : vector<4x1024xf32>
    %36 = math.log %32 : vector<4x1024xf32>
    %cst_4 = arith.constant -2.000000e+00 : f32
    %37 = vector.broadcast %cst_4 : f32 to vector<4x1024xf32>
    %38 = arith.mulf %37, %36 : vector<4x1024xf32>
    %39 = math.sqrt %38 : vector<4x1024xf32>
    %cst_5 = arith.constant 6.28318548 : f32
    %40 = vector.broadcast %cst_5 : f32 to vector<4x1024xf32>
    %41 = arith.mulf %40, %35 : vector<4x1024xf32>
    %42 = math.cos %41 : vector<4x1024xf32>
    %43 = arith.mulf %39, %42 : vector<4x1024xf32>
    %44 = math.sin %41 : vector<4x1024xf32>
    %45 = arith.mulf %39, %44 : vector<4x1024xf32>
    %46 = tpu.concatenate %43, %45 in 0 : vector<4x1024xf32>, vector<4x1024xf32> -> vector<8x1024xf32>
    %cst_6 = arith.constant 1.000000e+00 : f32
    %47 = vector.broadcast %cst_6 : f32 to vector<8x1024xf32>
    %48 = arith.mulf %46, %47 : vector<8x1024xf32>
    %cst_7 = arith.constant 0.000000e+00 : f32
    %49 = vector.broadcast %cst_7 : f32 to vector<8x1024xf32>
    %50 = arith.addf %48, %49 : vector<8x1024xf32>
    %c0_8 = arith.constant 0 : index
    %c0_9 = arith.constant 0 : index
    %51 = vector.load %arg2[%c0_8, %c0_9] : memref<8x1024xf32, #tpu.memory_space<vmem>>, vector<8x1024xf32>
    %52 = arith.addf %51, %50 : vector<8x1024xf32>
    %c0_10 = arith.constant 0 : index
    %c0_11 = arith.constant 0 : index
    %53 = vector.load %arg3[%c0_10, %c0_11] : memref<8x1024xf32, #tpu.memory_space<vmem>>, vector<8x1024xf32>
    tpu.vector_store %arg3[%c0_10, %c0_11], %52 {strides = array<i32>} : memref<8x1024xf32, #tpu.memory_space<vmem>>, vector<8x1024xf32>,
    return
  }
  func.func @transform_0(%arg0: i32) -> i32 {
    %c0_i32 = arith.constant 0 : i32
    %c0_i32_0 = arith.constant 0 : i32
    return %c0_i32 : i32
  }
  func.func @transform_1(%arg0: i32) -> (i32, i32) {
    %c0_i32 = arith.constant 0 : i32
    %c0_i32_0 = arith.constant 0 : i32
    return %arg0, %c0_i32 : i32, i32
  }
  func.func @transform_2(%arg0: i32) -> (i32, i32) {
    %c0_i32 = arith.constant 0 : i32
    %c0_i32_0 = arith.constant 0 : i32
    return %arg0, %c0_i32 : i32, i32
  }
}

</mosaic_0001>

<llo_original>
// kernel: tpu_custom_call.1
$region0: #{tpu_custom_call.1}
  #allocation0 [shape = 'u32[]', space=smem, size = 0x4, offset = 0x4, fixed_abs, tag = 'smem constant byte address 0x4 - core index']
  #allocation1 [shape = 'u32[144,128]{1,0:T(1,128)}', space=vmem, size = 0x12000, scoped, tag = 'internal scratch']
  #allocation2 [shape = 's32[1]{0:T(128)S(6)}', space=smem, size = 0x200, scoped, tag = 'scoped memory for tpu_custom_call.1']
  %s0 = inlined_call_operand.<no memory space> [shape: s32[1], index: 0, kind: input, shape index: {}]
  %s1 = inlined_call_operand.hbm [shape: f32[8,1024], index: 1, kind: input, shape index: {}]
  %s2 = inlined_call_operand.hbm [shape: f32[8,1024], index: 2, kind: output, shape index: {}]
  %s3 = sld [smem:[#allocation0]]
  $region22: #{tpu_custom_call.1} parent=0
    _
  %s5 = ssub.s32 1, %s3
  %s6 = scalar_select 0, %s5, %s3
  %7 = sst [smem:[#allocation2]] %s0
  $region1: #{tpu_custom_call.1} parent=0
    #allocation3 [shape = 'u8[32768]{0}', space=vmem, size = 0x8000, scoped, tag = 'input window, operand 1, single buffered']
    #allocation4 [shape = 's32[1]{0}', space=sflag, size = 0x4, scoped, tag = 'scoped memory for tpu_custom_call.1']
    #allocation5 [shape = 's32[1]{0}', space=sflag, size = 0x4, scoped, tag = 'scoped memory for tpu_custom_call.1']
    #allocation6 [shape = 'u8[32768]{0}', space=vmem, size = 0x8000, scoped, tag = 'output window, operand 0, single buffered']
    %8 = vsyncpa [#allocation4], 0
    %9 = vsyncpa [#allocation5], 0
    // Predicated region
    $region2: #{tpu_custom_call.1} parent=1 // pred_check
      _
    $region3: #{tpu_custom_call.1} parent=1 // pred_check_branch
      %11 = sbr.rel (0) target = $region5
    $region4: #{tpu_custom_call.1} parent=1 // pred_region
      _
    $region5: #{tpu_custom_call.1} parent=1 // pred_fallthru
      _
    // Predicated region
    $region6: #{tpu_custom_call.1} parent=1 // pred_check
      _
    $region7: #{tpu_custom_call.1} parent=1 // pred_check_branch
      %13 = sbr.rel (0) target = $region9
    $region8: #{tpu_custom_call.1} parent=1 // pred_region
      %s15 = ssub.s32 1024, 1024
      %16 = vsyncadd [#allocation4], %s15
      %s18 = sshll.u32 [#allocation3], 4
      %s19 = int_to_ptr.vmem [resolvable:$true] %s18
      %21 = dma.hbm_to_vmem [thread:$0]  %s1, 1024, %s19, [#allocation4]
    $region9: #{tpu_custom_call.1} parent=1 // pred_fallthru
      _
    // Predicated region
    $region10: #{tpu_custom_call.1} parent=1 // pred_check
      _
    $region11: #{tpu_custom_call.1} parent=1 // pred_check_branch
      %23 = sbr.rel (0) target = $region13
    $region12: #{tpu_custom_call.1} parent=1 // pred_region
      %24 = dma.done [#allocation4], 1024
    $region13: #{tpu_custom_call.1} parent=1 // pred_fallthru
      _
    %s25 = sld [smem:[#allocation2]]
    %s26 = smul.u32 0, 4
    %v27 = vlaneseq
    %v28 = vshrl.u32 %v27, 7
    %v29 = vlaneseq
    %v30 = vand.u32 %v29, 127
    %v31 = vadd.s32 %v30, 128
    %v32 = vadd.s32 %v30, 256
    %v33 = vadd.s32 %v30, 384
    %v34 = vadd.s32 %v30, 512
    %v35 = vadd.s32 %v30, 640
    %v36 = vadd.s32 %v30, 768
    %v37 = vadd.s32 %v30, 896
    %v38 = vstv %s26
    %v39 = vadd.s32 %v38, %v28
    %v40 = vmul.u32 %v39, 1024
    %v41 = vadd.s32 %v40, %v30
    %v42 = vadd.s32 %v40, %v31
    %v43 = vadd.s32 %v40, %v32
    %v44 = vadd.s32 %v40, %v33
    %v45 = vadd.s32 %v40, %v34
    %v46 = vadd.s32 %v40, %v35
    %v47 = vadd.s32 %v40, %v36
    %v48 = vadd.s32 %v40, %v37
    %v49 = vstv %s25
    %v50 = vxor.u32 %v41, %v49
    %v51 = vxor.u32 %v42, %v49
    %v52 = vxor.u32 %v43, %v49
    %v53 = vxor.u32 %v44, %v49
    %v54 = vxor.u32 %v45, %v49
    %v55 = vxor.u32 %v46, %v49
    %v56 = vxor.u32 %v47, %v49
    %v57 = vxor.u32 %v48, %v49
    %v58 = vshrl.u32 %v50, 16
    %v59 = vshrl.u32 %v51, 16
    %v60 = vshrl.u32 %v52, 16
    %v61 = vshrl.u32 %v53, 16
    %v62 = vshrl.u32 %v54, 16
    %v63 = vshrl.u32 %v55, 16
    %v64 = vshrl.u32 %v56, 16
    %v65 = vshrl.u32 %v57, 16
    %v66 = vxor.u32 %v50, %v58
    %v67 = vxor.u32 %v51, %v59
    %v68 = vxor.u32 %v52, %v60
    %v69 = vxor.u32 %v53, %v61
    %v70 = vxor.u32 %v54, %v62
    %v71 = vxor.u32 %v55, %v63
    %v72 = vxor.u32 %v56, %v64
    %v73 = vxor.u32 %v57, %v65
    %v74 = vmul.u32 %v66, 2146121005
    %v75 = vmul.u32 %v67, 2146121005
    %v76 = vmul.u32 %v68, 2146121005
    %v77 = vmul.u32 %v69, 2146121005
    %v78 = vmul.u32 %v70, 2146121005
    %v79 = vmul.u32 %v71, 2146121005
    %v80 = vmul.u32 %v72, 2146121005
    %v81 = vmul.u32 %v73, 2146121005
    %v82 = vshrl.u32 %v74, 15
    %v83 = vshrl.u32 %v75, 15
    %v84 = vshrl.u32 %v76, 15
    %v85 = vshrl.u32 %v77, 15
    %v86 = vshrl.u32 %v78, 15
    %v87 = vshrl.u32 %v79, 15
    %v88 = vshrl.u32 %v80, 15
    %v89 = vshrl.u32 %v81, 15
    %v90 = vxor.u32 %v74, %v82
    %v91 = vxor.u32 %v75, %v83
    %v92 = vxor.u32 %v76, %v84
    %v93 = vxor.u32 %v77, %v85
    %v94 = vxor.u32 %v78, %v86
    %v95 = vxor.u32 %v79, %v87
    %v96 = vxor.u32 %v80, %v88
    %v97 = vxor.u32 %v81, %v89
    %v98 = vmul.u32 %v90, 2221713035
    %v99 = vmul.u32 %v91, 2221713035
    %v100 = vmul.u32 %v92, 2221713035
    %v101 = vmul.u32 %v93, 2221713035
    %v102 = vmul.u32 %v94, 2221713035
    %v103 = vmul.u32 %v95, 2221713035
    %v104 = vmul.u32 %v96, 2221713035
    %v105 = vmul.u32 %v97, 2221713035
    %v106 = vshrl.u32 %v98, 16
    %v107 = vshrl.u32 %v99, 16
    %v108 = vshrl.u32 %v100, 16
    %v109 = vshrl.u32 %v101, 16
    %v110 = vshrl.u32 %v102, 16
    %v111 = vshrl.u32 %v103, 16
    %v112 = vshrl.u32 %v104, 16
    %v113 = vshrl.u32 %v105, 16
    %v114 = vxor.u32 %v98, %v106
    %v115 = vxor.u32 %v99, %v107
    %v116 = vxor.u32 %v100, %v108
    %v117 = vxor.u32 %v101, %v109
    %v118 = vxor.u32 %v102, %v110
    %v119 = vxor.u32 %v103, %v111
    %v120 = vxor.u32 %v104, %v112
    %v121 = vxor.u32 %v105, %v113
    %v122 = vshrl.u32 %v114, 16
    %v123 = vshrl.u32 %v115, 16
    %v124 = vshrl.u32 %v116, 16
    %v125 = vshrl.u32 %v117, 16
    %v126 = vshrl.u32 %v118, 16
    %v127 = vshrl.u32 %v119, 16
    %v128 = vshrl.u32 %v120, 16
    %v129 = vshrl.u32 %v121, 16
    %v130 = vand.u32 %v114, 65535
    %v131 = vand.u32 %v115, 65535
    %v132 = vand.u32 %v116, 65535
    %v133 = vand.u32 %v117, 65535
    %v134 = vand.u32 %v118, 65535
    %v135 = vand.u32 %v119, 65535
    %v136 = vand.u32 %v120, 65535
    %v137 = vand.u32 %v121, 65535
    %v138 = vcvt.s32.f32 %v122
    %v139 = vcvt.s32.f32 %v123
    %v140 = vcvt.s32.f32 %v124
    %v141 = vcvt.s32.f32 %v125
    %v142 = vcvt.s32.f32 %v126
    %v143 = vcvt.s32.f32 %v127
    %v144 = vcvt.s32.f32 %v128
    %v145 = vcvt.s32.f32 %v129
    %v146 = vadd.f32 %v138, 1.0
    %v147 = vadd.f32 %v139, 1.0
    %v148 = vadd.f32 %v140, 1.0
    %v149 = vadd.f32 %v141, 1.0
    %v150 = vadd.f32 %v142, 1.0
    %v151 = vadd.f32 %v143, 1.0
    %v152 = vadd.f32 %v144, 1.0
    %v153 = vadd.f32 %v145, 1.0
    %v154 = vmul.f32 %v146, 1.5258789e-05
    %v155 = vmul.f32 %v147, 1.5258789e-05
    %v156 = vmul.f32 %v148, 1.5258789e-05
    %v157 = vmul.f32 %v149, 1.5258789e-05
    %v158 = vmul.f32 %v150, 1.5258789e-05
    %v159 = vmul.f32 %v151, 1.5258789e-05
    %v160 = vmul.f32 %v152, 1.5258789e-05
    %v161 = vmul.f32 %v153, 1.5258789e-05
    %v162 = vcvt.s32.f32 %v130
    %v163 = vcvt.s32.f32 %v131
    %v164 = vcvt.s32.f32 %v132
    %v165 = vcvt.s32.f32 %v133
    %v166 = vcvt.s32.f32 %v134
    %v167 = vcvt.s32.f32 %v135
    %v168 = vcvt.s32.f32 %v136
    %v169 = vcvt.s32.f32 %v137
    %v170 = vmul.f32 %v162, 1.5258789e-05
    %v171 = vmul.f32 %v163, 1.5258789e-05
    %v172 = vmul.f32 %v164, 1.5258789e-05
    %v173 = vmul.f32 %v165, 1.5258789e-05
    %v174 = vmul.f32 %v166, 1.5258789e-05
    %v175 = vmul.f32 %v167, 1.5258789e-05
    %v176 = vmul.f32 %v168, 1.5258789e-05
    %v177 = vmul.f32 %v169, 1.5258789e-05
    %v178 = vlog2.pop %v154
    %v179 = vmul.f32 %v178, 0.6931472
    %v180 = vlog2.pop %v155
    %v181 = vmul.f32 %v180, 0.6931472
    %v182 = vlog2.pop %v156
    %v183 = vmul.f32 %v182, 0.6931472
    %v184 = vlog2.pop %v157
    %v185 = vmul.f32 %v184, 0.6931472
    %v186 = vlog2.pop %v158
    %v187 = vmul.f32 %v186, 0.6931472
    %v188 = vlog2.pop %v159
    %v189 = vmul.f32 %v188, 0.6931472
    %v190 = vlog2.pop %v160
    %v191 = vmul.f32 %v190, 0.6931472
    %v192 = vlog2.pop %v161
    %v193 = vmul.f32 %v192, 0.6931472
    %v194 = vmul.f32 %v179, -2.0
    %v195 = vmul.f32 %v181, -2.0
    %v196 = vmul.f32 %v183, -2.0
    %v197 = vmul.f32 %v185, -2.0
    %v198 = vmul.f32 %v187, -2.0
    %v199 = vmul.f32 %v189, -2.0
    %v200 = vmul.f32 %v191, -2.0
    %v201 = vmul.f32 %v193, -2.0
    %v202 = vrsqrt.pop %v194
    %v203 = vmul.f32 %v194, %v202
    %vm204 = vcmp.eq.f32.partialorder %v194, inf
    %v205 = vsel %vm204, %v194, %v203
    %vm206 = vcmp.eq.f32.partialorder %v194, 0.0
    %v207 = vand.u32 %v194, 2147483648
    %v208 = vsel %vm206, %v207, %v205
    %v209 = vrsqrt.pop %v195
    %v210 = vmul.f32 %v195, %v209
    %vm211 = vcmp.eq.f32.partialorder %v195, inf
    %v212 = vsel %vm211, %v195, %v210
    %vm213 = vcmp.eq.f32.partialorder %v195, 0.0
    %v214 = vand.u32 %v195, 2147483648
    %v215 = vsel %vm213, %v214, %v212
    %v216 = vrsqrt.pop %v196
    %v217 = vmul.f32 %v196, %v216
    %vm218 = vcmp.eq.f32.partialorder %v196, inf
    %v219 = vsel %vm218, %v196, %v217
    %vm220 = vcmp.eq.f32.partialorder %v196, 0.0
    %v221 = vand.u32 %v196, 2147483648
    %v222 = vsel %vm220, %v221, %v219
    %v223 = vrsqrt.pop %v197
    %v224 = vmul.f32 %v197, %v223
    %vm225 = vcmp.eq.f32.partialorder %v197, inf
    %v226 = vsel %vm225, %v197, %v224
    %vm227 = vcmp.eq.f32.partialorder %v197, 0.0
    %v228 = vand.u32 %v197, 2147483648
    %v229 = vsel %vm227, %v228, %v226
    %v230 = vrsqrt.pop %v198
    %v231 = vmul.f32 %v198, %v230
    %vm232 = vcmp.eq.f32.partialorder %v198, inf
    %v233 = vsel %vm232, %v198, %v231
    %vm234 = vcmp.eq.f32.partialorder %v198, 0.0
    %v235 = vand.u32 %v198, 2147483648
    %v236 = vsel %vm234, %v235, %v233
    %v237 = vrsqrt.pop %v199
    %v238 = vmul.f32 %v199, %v237
    %vm239 = vcmp.eq.f32.partialorder %v199, inf
    %v240 = vsel %vm239, %v199, %v238
    %vm241 = vcmp.eq.f32.partialorder %v199, 0.0
    %v242 = vand.u32 %v199, 2147483648
    %v243 = vsel %vm241, %v242, %v240
    %v244 = vrsqrt.pop %v200
    %v245 = vmul.f32 %v200, %v244
    %vm246 = vcmp.eq.f32.partialorder %v200, inf
    %v247 = vsel %vm246, %v200, %v245
    %vm248 = vcmp.eq.f32.partialorder %v200, 0.0
    %v249 = vand.u32 %v200, 2147483648
    %v250 = vsel %vm248, %v249, %v247
    %v251 = vrsqrt.pop %v201
    %v252 = vmul.f32 %v201, %v251
    %vm253 = vcmp.eq.f32.partialorder %v201, inf
    %v254 = vsel %vm253, %v201, %v252
    %vm255 = vcmp.eq.f32.partialorder %v201, 0.0
    %v256 = vand.u32 %v201, 2147483648
    %v257 = vsel %vm255, %v256, %v254
    %v258 = vmul.f32 %v170, 6.2831855
    %v259 = vmul.f32 %v171, 6.2831855
    %v260 = vmul.f32 %v172, 6.2831855
    %v261 = vmul.f32 %v173, 6.2831855
    %v262 = vmul.f32 %v174, 6.2831855
    %v263 = vmul.f32 %v175, 6.2831855
    %v264 = vmul.f32 %v176, 6.2831855
    %v265 = vmul.f32 %v177, 6.2831855
    %v266 = vand.u32 2147483647, %v258
    %vm267 = vcmp.le.f32.partialorder %v266, 0.7853982
    %vm268 = vcmp.lt.s32.totalorder %v258, 0
    %v269 = vand.u32 %v258, 2139095040
    %v270 = vshrl.u32 %v269, 23
    %v271 = vsub.s32 %v270, 127
    %v272 = vand.u32 2147483647, %v258
    %v273 = vand.u32 %v272, 8388607
    %v274 = vor.u32 %v273, 8388608
    %v275 = vsub.s32 0, %v274
    %v276 = vadd.s32 %v271, 1
    %vm277 = vcmp.gt.s32.totalorder %v276, 0
    %v278 = vsel %vm277, %v276, 0
    %v279 = vshrl.u32 %v278, 5
    %v280 = vand.u32 %v278, 31
    %v281 = vsub.s32 32, %v280
    %v282 = vshrl.u32 683565275, %v281
    %v283 = vshll.u32 683565275, %v280
    %v284 = vshrl.u32 2475754826, %v281
    %v285 = vor.u32 %v283, %v284
    %v286 = vshll.u32 2475754826, %v280
    %v287 = vshrl.u32 2131351028, %v281
    %v288 = vor.u32 %v286, %v287
    %v289 = vshll.u32 2131351028, %v280
    %v290 = vshrl.u32 2102212464, %v281
    %v291 = vor.u32 %v289, %v290
    %v292 = vshll.u32 2102212464, %v280
    %v293 = vshrl.u32 920167782, %v281
    %v294 = vor.u32 %v292, %v293
    %v295 = vshll.u32 920167782, %v280
    %v296 = vshrl.u32 1326507024, %v281
    %v297 = vor.u32 %v295, %v296
    %vm298 = vcmp.lt.s32.totalorder %v279, 1
    %vm299 = vcmp.lt.s32.totalorder %v279, 2
    %vm300 = vcmp.lt.s32.totalorder %v279, 3
    %vm301 = vcmp.lt.s32.totalorder %v279, 4
    %v302 = vsel %vm298, %v282, %v285
    %v303 = vsel %vm301, %v291, 2102212464
    %v304 = vsel %vm300, %v288, %v303
    %v305 = vsel %vm299, %v302, %v304
    %v306 = vsel %vm298, %v285, %v288
    %v307 = vsel %vm301, %v294, 920167782
    %v308 = vsel %vm300, %v291, %v307
    %v309 = vsel %vm299, %v306, %v308
    %v310 = vsel %vm298, %v288, %v291
    %v311 = vsel %vm301, %v297, 1326507024
    %v312 = vsel %vm300, %v294, %v311
    %v313 = vsel %vm299, %v310, %v312
    %v314 = vshll.u32 %v274, 8
    %v315 = vmul.u32.u64.compose %v314, %v313
    %v316 = vextract.low.u32 %v315
    %v317 = vextract.high.u32 %v315
    %v318 = vmul.u32.u64.compose %v314, %v309
    %v319 = vextract.low.u32 %v318
    %v320 = vextract.high.u32 %v318
    %v321 = vmul.u32 %v314, %v305
    %v322 = vadd.s32 %v317, %v319
    %vm323 = vc.u32 %v317, %v319
    %v324 = vadd.s32 %v320, 1
    %v325 = vsel %vm323, %v324, %v320
    %v326 = vadd.s32 %v321, %v325
    %v327 = vadd.s32 %v326, 536870912
    %v328 = vshrl.u32 %v327, 30
    %v329 = vshll.u32 %v328, 30
    %v330 = vsub.s32 %v326, %v329
    %vm331 = vcmp.lt.s32.totalorder %v330, 0
    %v332 = vsub.s32 0, %v330
    %v333 = vsel %vm331, %v332, %v330
    %v334 = vclz %v333
    %v335 = vsub.s32 %v334, 2
    %vm336 = vcmp.gt.s32.totalorder 0, %v335
    %v337 = vsel %vm336, 0, %v335
    %v338 = vsub.s32 32, %v337
    %v339 = vshll.u32 %v330, %v337
    %v340 = vshrl.u32 %v322, %v338
    %v341 = vor.u32 %v339, %v340
    %v342 = vsub.s32 4294967266, %v337
    %v343 = vadd.s32 %v342, 127
    %v344 = vshll.u32 %v343, 23
    %v345 = vor.u32 4788187, %v344
    %v346 = vand.u32 2147483647, %v345
    %v348 = vcvt.s32.f32 %v341
    %v349 = vmul.f32 %v348, %v346
    %v350 = vxor.u32 %v349, 2147483648
    %v351 = vsel %vm268, %v350, %v349
    %v352 = vsub.s32 4, %v328
    %v353 = vsel %vm268, %v352, %v328
    %v354 = vsel %vm267, %v258, %v351
    %v355 = vsel %vm267, 0, %v353
    %v356 = vcosq.f32.pop %v354
    %v357 = vsinq.f32.pop %v354
    %vm358 = vweird.f32 %v258
    %v359 = vand.u32 %v355, 3
    %vm360 = vcmp.lt.s32.totalorder %v359, 2
    %vm361 = vcmp.eq.s32.totalorder %v359, 0
    %v362 = vxor.u32 %v357, 2147483648
    %v363 = vsel %vm361, %v356, %v362
    %vm364 = vcmp.eq.s32.totalorder %v359, 2
    %v365 = vxor.u32 %v356, 2147483648
    %v366 = vsel %vm364, %v365, %v357
    %v367 = vsel %vm360, %v363, %v366
    %v368 = vsel %vm358, nan, %v367
    %v369 = vand.u32 2147483647, %v259
    %vm370 = vcmp.le.f32.partialorder %v369, 0.7853982
    %vm371 = vcmp.lt.s32.totalorder %v259, 0
    %v372 = vand.u32 %v259, 2139095040
    %v373 = vshrl.u32 %v372, 23
    %v374 = vsub.s32 %v373, 127
    %v375 = vand.u32 2147483647, %v259
    %v376 = vand.u32 %v375, 8388607
    %v377 = vor.u32 %v376, 8388608
    %v378 = vsub.s32 0, %v377
    %v379 = vadd.s32 %v374, 1
    %vm380 = vcmp.gt.s32.totalorder %v379, 0
    %v381 = vsel %vm380, %v379, 0
    %v382 = vshrl.u32 %v381, 5
    %v383 = vand.u32 %v381, 31
    %v384 = vsub.s32 32, %v383
    %v385 = vshrl.u32 683565275, %v384
    %v386 = vshll.u32 683565275, %v383
    %v387 = vshrl.u32 2475754826, %v384
    %v388 = vor.u32 %v386, %v387
    %v389 = vshll.u32 2475754826, %v383
    %v390 = vshrl.u32 2131351028, %v384
    %v391 = vor.u32 %v389, %v390
    %v392 = vshll.u32 2131351028, %v383
    %v393 = vshrl.u32 2102212464, %v384
    %v394 = vor.u32 %v392, %v393
    %v395 = vshll.u32 2102212464, %v383
    %v396 = vshrl.u32 920167782, %v384
    %v397 = vor.u32 %v395, %v396
    %v398 = vshll.u32 920167782, %v383
    %v399 = vshrl.u32 1326507024, %v384
    %v400 = vor.u32 %v398, %v399
    %vm401 = vcmp.lt.s32.totalorder %v382, 1
    %vm402 = vcmp.lt.s32.totalorder %v382, 2
    %vm403 = vcmp.lt.s32.totalorder %v382, 3
    %vm404 = vcmp.lt.s32.totalorder %v382, 4
    %v405 = vsel %vm401, %v385, %v388
    %v406 = vsel %vm404, %v394, 2102212464
    %v407 = vsel %vm403, %v391, %v406
    %v408 = vsel %vm402, %v405, %v407
    %v409 = vsel %vm401, %v388, %v391
    %v410 = vsel %vm404, %v397, 920167782
    %v411 = vsel %vm403, %v394, %v410
    %v412 = vsel %vm402, %v409, %v411
    %v413 = vsel %vm401, %v391, %v394
    %v414 = vsel %vm404, %v400, 1326507024
    %v415 = vsel %vm403, %v397, %v414
    %v416 = vsel %vm402, %v413, %v415
    %v417 = vshll.u32 %v377, 8
    %v418 = vmul.u32.u64.compose %v417, %v416
    %v419 = vextract.low.u32 %v418
    %v420 = vextract.high.u32 %v418
    %v421 = vmul.u32.u64.compose %v417, %v412
    %v422 = vextract.low.u32 %v421
    %v423 = vextract.high.u32 %v421
    %v424 = vmul.u32 %v417, %v408
    %v425 = vadd.s32 %v420, %v422
    %vm426 = vc.u32 %v420, %v422
    %v427 = vadd.s32 %v423, 1
    %v428 = vsel %vm426, %v427, %v423
    %v429 = vadd.s32 %v424, %v428
    %v430 = vadd.s32 %v429, 536870912
    %v431 = vshrl.u32 %v430, 30
    %v432 = vshll.u32 %v431, 30
    %v433 = vsub.s32 %v429, %v432
    %vm434 = vcmp.lt.s32.totalorder %v433, 0
    %v435 = vsub.s32 0, %v433
    %v436 = vsel %vm434, %v435, %v433
    %v437 = vclz %v436
    %v438 = vsub.s32 %v437, 2
    %vm439 = vcmp.gt.s32.totalorder 0, %v438
    %v440 = vsel %vm439, 0, %v438
    %v441 = vsub.s32 32, %v440
    %v442 = vshll.u32 %v433, %v440
    %v443 = vshrl.u32 %v425, %v441
    %v444 = vor.u32 %v442, %v443
    %v445 = vsub.s32 4294967266, %v440
    %v446 = vadd.s32 %v445, 127
    %v447 = vshll.u32 %v446, 23
    %v448 = vor.u32 4788187, %v447
    %v449 = vand.u32 2147483647, %v448
    %v451 = vcvt.s32.f32 %v444
    %v452 = vmul.f32 %v451, %v449
    %v453 = vxor.u32 %v452, 2147483648
    %v454 = vsel %vm371, %v453, %v452
    %v455 = vsub.s32 4, %v431
    %v456 = vsel %vm371, %v455, %v431
    %v457 = vsel %vm370, %v259, %v454
    %v458 = vsel %vm370, 0, %v456
    %v459 = vcosq.f32.pop %v457
    %v460 = vsinq.f32.pop %v457
    %vm461 = vweird.f32 %v259
    %v462 = vand.u32 %v458, 3
    %vm463 = vcmp.lt.s32.totalorder %v462, 2
    %vm464 = vcmp.eq.s32.totalorder %v462, 0
    %v465 = vxor.u32 %v460, 2147483648
    %v466 = vsel %vm464, %v459, %v465
    %vm467 = vcmp.eq.s32.totalorder %v462, 2
    %v468 = vxor.u32 %v459, 2147483648
    %v469 = vsel %vm467, %v468, %v460
    %v470 = vsel %vm463, %v466, %v469
    %v471 = vsel %vm461, nan, %v470
    %v472 = vand.u32 2147483647, %v260
    %vm473 = vcmp.le.f32.partialorder %v472, 0.7853982
    %vm474 = vcmp.lt.s32.totalorder %v260, 0
    %v475 = vand.u32 %v260, 2139095040
    %v476 = vshrl.u32 %v475, 23
    %v477 = vsub.s32 %v476, 127
    %v478 = vand.u32 2147483647, %v260
    %v479 = vand.u32 %v478, 8388607
    %v480 = vor.u32 %v479, 8388608
    %v481 = vsub.s32 0, %v480
    %v482 = vadd.s32 %v477, 1
    %vm483 = vcmp.gt.s32.totalorder %v482, 0
    %v484 = vsel %vm483, %v482, 0
    %v485 = vshrl.u32 %v484, 5
    %v486 = vand.u32 %v484, 31
    %v487 = vsub.s32 32, %v486
    %v488 = vshrl.u32 683565275, %v487
    %v489 = vshll.u32 683565275, %v486
    %v490 = vshrl.u32 2475754826, %v487
    %v491 = vor.u32 %v489, %v490
    %v492 = vshll.u32 2475754826, %v486
    %v493 = vshrl.u32 2131351028, %v487
    %v494 = vor.u32 %v492, %v493
    %v495 = vshll.u32 2131351028, %v486
    %v496 = vshrl.u32 2102212464, %v487
    %v497 = vor.u32 %v495, %v496
    %v498 = vshll.u32 2102212464, %v486
    %v499 = vshrl.u32 920167782, %v487
    %v500 = vor.u32 %v498, %v499
    %v501 = vshll.u32 920167782, %v486
    %v502 = vshrl.u32 1326507024, %v487
    %v503 = vor.u32 %v501, %v502
    %vm504 = vcmp.lt.s32.totalorder %v485, 1
    %vm505 = vcmp.lt.s32.totalorder %v485, 2
    %vm506 = vcmp.lt.s32.totalorder %v485, 3
    %vm507 = vcmp.lt.s32.totalorder %v485, 4
    %v508 = vsel %vm504, %v488, %v491
    %v509 = vsel %vm507, %v497, 2102212464
    %v510 = vsel %vm506, %v494, %v509
    %v511 = vsel %vm505, %v508, %v510
    %v512 = vsel %vm504, %v491, %v494
    %v513 = vsel %vm507, %v500, 920167782
    %v514 = vsel %vm506, %v497, %v513
    %v515 = vsel %vm505, %v512, %v514
    %v516 = vsel %vm504, %v494, %v497
    %v517 = vsel %vm507, %v503, 1326507024
    %v518 = vsel %vm506, %v500, %v517
    %v519 = vsel %vm505, %v516, %v518
    %v520 = vshll.u32 %v480, 8
    %v521 = vmul.u32.u64.compose %v520, %v519
    %v522 = vextract.low.u32 %v521
    %v523 = vextract.high.u32 %v521
    %v524 = vmul.u32.u64.compose %v520, %v515
    %v525 = vextract.low.u32 %v524
    %v526 = vextract.high.u32 %v524
    %v527 = vmul.u32 %v520, %v511
    %v528 = vadd.s32 %v523, %v525
    %vm529 = vc.u32 %v523, %v525
    %v530 = vadd.s32 %v526, 1
    %v531 = vsel %vm529, %v530, %v526
    %v532 = vadd.s32 %v527, %v531
    %v533 = vadd.s32 %v532, 536870912
    %v534 = vshrl.u32 %v533, 30
    %v535 = vshll.u32 %v534, 30
    %v536 = vsub.s32 %v532, %v535
    %vm537 = vcmp.lt.s32.totalorder %v536, 0
    %v538 = vsub.s32 0, %v536
    %v539 = vsel %vm537, %v538, %v536
    %v540 = vclz %v539
    %v541 = vsub.s32 %v540, 2
    %vm542 = vcmp.gt.s32.totalorder 0, %v541
    %v543 = vsel %vm542, 0, %v541
    %v544 = vsub.s32 32, %v543
    %v545 = vshll.u32 %v536, %v543
    %v546 = vshrl.u32 %v528, %v544
    %v547 = vor.u32 %v545, %v546
    %v548 = vsub.s32 4294967266, %v543
    %v549 = vadd.s32 %v548, 127
    %v550 = vshll.u32 %v549, 23
    %v551 = vor.u32 4788187, %v550
    %v552 = vand.u32 2147483647, %v551
    %v554 = vcvt.s32.f32 %v547
    %v555 = vmul.f32 %v554, %v552
    %v556 = vxor.u32 %v555, 2147483648
    %v557 = vsel %vm474, %v556, %v555
    %v558 = vsub.s32 4, %v534
    %v559 = vsel %vm474, %v558, %v534
    %v560 = vsel %vm473, %v260, %v557
    %v561 = vsel %vm473, 0, %v559
    %v562 = vcosq.f32.pop %v560
    %v563 = vsinq.f32.pop %v560
    %vm564 = vweird.f32 %v260
    %v565 = vand.u32 %v561, 3
    %vm566 = vcmp.lt.s32.totalorder %v565, 2
    %vm567 = vcmp.eq.s32.totalorder %v565, 0
    %v568 = vxor.u32 %v563, 2147483648
    %v569 = vsel %vm567, %v562, %v568
    %vm570 = vcmp.eq.s32.totalorder %v565, 2
    %v571 = vxor.u32 %v562, 2147483648
    %v572 = vsel %vm570, %v571, %v563
    %v573 = vsel %vm566, %v569, %v572
    %v574 = vsel %vm564, nan, %v573
    %v575 = vand.u32 2147483647, %v261
    %vm576 = vcmp.le.f32.partialorder %v575, 0.7853982
    %vm577 = vcmp.lt.s32.totalorder %v261, 0
    %v578 = vand.u32 %v261, 2139095040
    %v579 = vshrl.u32 %v578, 23
    %v580 = vsub.s32 %v579, 127
    %v581 = vand.u32 2147483647, %v261
    %v582 = vand.u32 %v581, 8388607
    %v583 = vor.u32 %v582, 8388608
    %v584 = vsub.s32 0, %v583
    %v585 = vadd.s32 %v580, 1
    %vm586 = vcmp.gt.s32.totalorder %v585, 0
    %v587 = vsel %vm586, %v585, 0
    %v588 = vshrl.u32 %v587, 5
    %v589 = vand.u32 %v587, 31
    %v590 = vsub.s32 32, %v589
    %v591 = vshrl.u32 683565275, %v590
    %v592 = vshll.u32 683565275, %v589
    %v593 = vshrl.u32 2475754826, %v590
    %v594 = vor.u32 %v592, %v593
    %v595 = vshll.u32 2475754826, %v589
    %v596 = vshrl.u32 2131351028, %v590
    %v597 = vor.u32 %v595, %v596
    %v598 = vshll.u32 2131351028, %v589
    %v599 = vshrl.u32 2102212464, %v590
    %v600 = vor.u32 %v598, %v599
    %v601 = vshll.u32 2102212464, %v589
    %v602 = vshrl.u32 920167782, %v590
    %v603 = vor.u32 %v601, %v602
    %v604 = vshll.u32 920167782, %v589
    %v605 = vshrl.u32 1326507024, %v590
    %v606 = vor.u32 %v604, %v605
    %vm607 = vcmp.lt.s32.totalorder %v588, 1
    %vm608 = vcmp.lt.s32.totalorder %v588, 2
    %vm609 = vcmp.lt.s32.totalorder %v588, 3
    %vm610 = vcmp.lt.s32.totalorder %v588, 4
    %v611 = vsel %vm607, %v591, %v594
    %v612 = vsel %vm610, %v600, 2102212464
    %v613 = vsel %vm609, %v597, %v612
    %v614 = vsel %vm608, %v611, %v613
    %v615 = vsel %vm607, %v594, %v597
    %v616 = vsel %vm610, %v603, 920167782
    %v617 = vsel %vm609, %v600, %v616
    %v618 = vsel %vm608, %v615, %v617
    %v619 = vsel %vm607, %v597, %v600
    %v620 = vsel %vm610, %v606, 1326507024
    %v621 = vsel %vm609, %v603, %v620
    %v622 = vsel %vm608, %v619, %v621
    %v623 = vshll.u32 %v583, 8
    %v624 = vmul.u32.u64.compose %v623, %v622
    %v625 = vextract.low.u32 %v624
    %v626 = vextract.high.u32 %v624
    %v627 = vmul.u32.u64.compose %v623, %v618
    %v628 = vextract.low.u32 %v627
    %v629 = vextract.high.u32 %v627
    %v630 = vmul.u32 %v623, %v614
    %v631 = vadd.s32 %v626, %v628
    %vm632 = vc.u32 %v626, %v628
    %v633 = vadd.s32 %v629, 1
    %v634 = vsel %vm632, %v633, %v629
    %v635 = vadd.s32 %v630, %v634
    %v636 = vadd.s32 %v635, 536870912
    %v637 = vshrl.u32 %v636, 30
    %v638 = vshll.u32 %v637, 30
    %v639 = vsub.s32 %v635, %v638
    %vm640 = vcmp.lt.s32.totalorder %v639, 0
    %v641 = vsub.s32 0, %v639
    %v642 = vsel %vm640, %v641, %v639
    %v643 = vclz %v642
    %v644 = vsub.s32 %v643, 2
    %vm645 = vcmp.gt.s32.totalorder 0, %v644
    %v646 = vsel %vm645, 0, %v644
    %v647 = vsub.s32 32, %v646
    %v648 = vshll.u32 %v639, %v646
    %v649 = vshrl.u32 %v631, %v647
    %v650 = vor.u32 %v648, %v649
    %v651 = vsub.s32 4294967266, %v646
    %v652 = vadd.s32 %v651, 127
    %v653 = vshll.u32 %v652, 23
    %v654 = vor.u32 4788187, %v653
    %v655 = vand.u32 2147483647, %v654
    %v657 = vcvt.s32.f32 %v650
    %v658 = vmul.f32 %v657, %v655
    %v659 = vxor.u32 %v658, 2147483648
    %v660 = vsel %vm577, %v659, %v658
    %v661 = vsub.s32 4, %v637
    %v662 = vsel %vm577, %v661, %v637
    %v663 = vsel %vm576, %v261, %v660
    %v664 = vsel %vm576, 0, %v662
    %v665 = vcosq.f32.pop %v663
    %v666 = vsinq.f32.pop %v663
    %vm667 = vweird.f32 %v261
    %v668 = vand.u32 %v664, 3
    %vm669 = vcmp.lt.s32.totalorder %v668, 2
    %vm670 = vcmp.eq.s32.totalorder %v668, 0
    %v671 = vxor.u32 %v666, 2147483648
    %v672 = vsel %vm670, %v665, %v671
    %vm673 = vcmp.eq.s32.totalorder %v668, 2
    %v674 = vxor.u32 %v665, 2147483648
    %v675 = vsel %vm673, %v674, %v666
    %v676 = vsel %vm669, %v672, %v675
    %v677 = vsel %vm667, nan, %v676
    %v678 = vand.u32 2147483647, %v262
    %vm679 = vcmp.le.f32.partialorder %v678, 0.7853982
    %vm680 = vcmp.lt.s32.totalorder %v262, 0
    %v681 = vand.u32 %v262, 2139095040
    %v682 = vshrl.u32 %v681, 23
    %v683 = vsub.s32 %v682, 127
    %v684 = vand.u32 2147483647, %v262
    %v685 = vand.u32 %v684, 8388607
    %v686 = vor.u32 %v685, 8388608
    %v687 = vsub.s32 0, %v686
    %v688 = vadd.s32 %v683, 1
    %vm689 = vcmp.gt.s32.totalorder %v688, 0
    %v690 = vsel %vm689, %v688, 0
    %v691 = vshrl.u32 %v690, 5
    %v692 = vand.u32 %v690, 31
    %v693 = vsub.s32 32, %v692
    %v694 = vshrl.u32 683565275, %v693
    %v695 = vshll.u32 683565275, %v692
    %v696 = vshrl.u32 2475754826, %v693
    %v697 = vor.u32 %v695, %v696
    %v698 = vshll.u32 2475754826, %v692
    %v699 = vshrl.u32 2131351028, %v693
    %v700 = vor.u32 %v698, %v699
    %v701 = vshll.u32 2131351028, %v692
    %v702 = vshrl.u32 2102212464, %v693
    %v703 = vor.u32 %v701, %v702
    %v704 = vshll.u32 2102212464, %v692
    %v705 = vshrl.u32 920167782, %v693
    %v706 = vor.u32 %v704, %v705
    %v707 = vshll.u32 920167782, %v692
    %v708 = vshrl.u32 1326507024, %v693
    %v709 = vor.u32 %v707, %v708
    %vm710 = vcmp.lt.s32.totalorder %v691, 1
    %vm711 = vcmp.lt.s32.totalorder %v691, 2
    %vm712 = vcmp.lt.s32.totalorder %v691, 3
    %vm713 = vcmp.lt.s32.totalorder %v691, 4
    %v714 = vsel %vm710, %v694, %v697
    %v715 = vsel %vm713, %v703, 2102212464
    %v716 = vsel %vm712, %v700, %v715
    %v717 = vsel %vm711, %v714, %v716
    %v718 = vsel %vm710, %v697, %v700
    %v719 = vsel %vm713, %v706, 920167782
    %v720 = vsel %vm712, %v703, %v719
    %v721 = vsel %vm711, %v718, %v720
    %v722 = vsel %vm710, %v700, %v703
    %v723 = vsel %vm713, %v709, 1326507024
    %v724 = vsel %vm712, %v706, %v723
    %v725 = vsel %vm711, %v722, %v724
    %v726 = vshll.u32 %v686, 8
    %v727 = vmul.u32.u64.compose %v726, %v725
    %v728 = vextract.low.u32 %v727
    %v729 = vextract.high.u32 %v727
    %v730 = vmul.u32.u64.compose %v726, %v721
    %v731 = vextract.low.u32 %v730
    %v732 = vextract.high.u32 %v730
    %v733 = vmul.u32 %v726, %v717
    %v734 = vadd.s32 %v729, %v731
    %vm735 = vc.u32 %v729, %v731
    %v736 = vadd.s32 %v732, 1
    %v737 = vsel %vm735, %v736, %v732
    %v738 = vadd.s32 %v733, %v737
    %v739 = vadd.s32 %v738, 536870912
    %v740 = vshrl.u32 %v739, 30
    %v741 = vshll.u32 %v740, 30
    %v742 = vsub.s32 %v738, %v741
    %vm743 = vcmp.lt.s32.totalorder %v742, 0
    %v744 = vsub.s32 0, %v742
    %v745 = vsel %vm743, %v744, %v742
    %v746 = vclz %v745
    %v747 = vsub.s32 %v746, 2
    %vm748 = vcmp.gt.s32.totalorder 0, %v747
    %v749 = vsel %vm748, 0, %v747
    %v750 = vsub.s32 32, %v749
    %v751 = vshll.u32 %v742, %v749
    %v752 = vshrl.u32 %v734, %v750
    %v753 = vor.u32 %v751, %v752
    %v754 = vsub.s32 4294967266, %v749
    %v755 = vadd.s32 %v754, 127
    %v756 = vshll.u32 %v755, 23
    %v757 = vor.u32 4788187, %v756
    %v758 = vand.u32 2147483647, %v757
    %v760 = vcvt.s32.f32 %v753
    %v761 = vmul.f32 %v760, %v758
    %v762 = vxor.u32 %v761, 2147483648
    %v763 = vsel %vm680, %v762, %v761
    %v764 = vsub.s32 4, %v740
    %v765 = vsel %vm680, %v764, %v740
    %v766 = vsel %vm679, %v262, %v763
    %v767 = vsel %vm679, 0, %v765
    %v768 = vcosq.f32.pop %v766
    %v769 = vsinq.f32.pop %v766
    %vm770 = vweird.f32 %v262
    %v771 = vand.u32 %v767, 3
    %vm772 = vcmp.lt.s32.totalorder %v771, 2
    %vm773 = vcmp.eq.s32.totalorder %v771, 0
    %v774 = vxor.u32 %v769, 2147483648
    %v775 = vsel %vm773, %v768, %v774
    %vm776 = vcmp.eq.s32.totalorder %v771, 2
    %v777 = vxor.u32 %v768, 2147483648
    %v778 = vsel %vm776, %v777, %v769
    %v779 = vsel %vm772, %v775, %v778
    %v780 = vsel %vm770, nan, %v779
    %v781 = vand.u32 2147483647, %v263
    %vm782 = vcmp.le.f32.partialorder %v781, 0.7853982
    %vm783 = vcmp.lt.s32.totalorder %v263, 0
    %v784 = vand.u32 %v263, 2139095040
    %v785 = vshrl.u32 %v784, 23
    %v786 = vsub.s32 %v785, 127
    %v787 = vand.u32 2147483647, %v263
    %v788 = vand.u32 %v787, 8388607
    %v789 = vor.u32 %v788, 8388608
    %v790 = vsub.s32 0, %v789
    %v791 = vadd.s32 %v786, 1
    %vm792 = vcmp.gt.s32.totalorder %v791, 0
    %v793 = vsel %vm792, %v791, 0
    %v794 = vshrl.u32 %v793, 5
    %v795 = vand.u32 %v793, 31
    %v796 = vsub.s32 32, %v795
    %v797 = vshrl.u32 683565275, %v796
    %v798 = vshll.u32 683565275, %v795
    %v799 = vshrl.u32 2475754826, %v796
    %v800 = vor.u32 %v798, %v799
    %v801 = vshll.u32 2475754826, %v795
    %v802 = vshrl.u32 2131351028, %v796
    %v803 = vor.u32 %v801, %v802
    %v804 = vshll.u32 2131351028, %v795
    %v805 = vshrl.u32 2102212464, %v796
    %v806 = vor.u32 %v804, %v805
    %v807 = vshll.u32 2102212464, %v795
    %v808 = vshrl.u32 920167782, %v796
    %v809 = vor.u32 %v807, %v808
    %v810 = vshll.u32 920167782, %v795
    %v811 = vshrl.u32 1326507024, %v796
    %v812 = vor.u32 %v810, %v811
    %vm813 = vcmp.lt.s32.totalorder %v794, 1
    %vm814 = vcmp.lt.s32.totalorder %v794, 2
    %vm815 = vcmp.lt.s32.totalorder %v794, 3
    %vm816 = vcmp.lt.s32.totalorder %v794, 4
    %v817 = vsel %vm813, %v797, %v800
    %v818 = vsel %vm816, %v806, 2102212464
    %v819 = vsel %vm815, %v803, %v818
    %v820 = vsel %vm814, %v817, %v819
    %v821 = vsel %vm813, %v800, %v803
    %v822 = vsel %vm816, %v809, 920167782
    %v823 = vsel %vm815, %v806, %v822
    %v824 = vsel %vm814, %v821, %v823
    %v825 = vsel %vm813, %v803, %v806
    %v826 = vsel %vm816, %v812, 1326507024
    %v827 = vsel %vm815, %v809, %v826
    %v828 = vsel %vm814, %v825, %v827
    %v829 = vshll.u32 %v789, 8
    %v830 = vmul.u32.u64.compose %v829, %v828
    %v831 = vextract.low.u32 %v830
    %v832 = vextract.high.u32 %v830
    %v833 = vmul.u32.u64.compose %v829, %v824
    %v834 = vextract.low.u32 %v833
    %v835 = vextract.high.u32 %v833
    %v836 = vmul.u32 %v829, %v820
    %v837 = vadd.s32 %v832, %v834
    %vm838 = vc.u32 %v832, %v834
    %v839 = vadd.s32 %v835, 1
    %v840 = vsel %vm838, %v839, %v835
    %v841 = vadd.s32 %v836, %v840
    %v842 = vadd.s32 %v841, 536870912
    %v843 = vshrl.u32 %v842, 30
    %v844 = vshll.u32 %v843, 30
    %v845 = vsub.s32 %v841, %v844
    %vm846 = vcmp.lt.s32.totalorder %v845, 0
    %v847 = vsub.s32 0, %v845
    %v848 = vsel %vm846, %v847, %v845
    %v849 = vclz %v848
    %v850 = vsub.s32 %v849, 2
    %vm851 = vcmp.gt.s32.totalorder 0, %v850
    %v852 = vsel %vm851, 0, %v850
    %v853 = vsub.s32 32, %v852
    %v854 = vshll.u32 %v845, %v852
    %v855 = vshrl.u32 %v837, %v853
    %v856 = vor.u32 %v854, %v855
    %v857 = vsub.s32 4294967266, %v852
    %v858 = vadd.s32 %v857, 127
    %v859 = vshll.u32 %v858, 23
    %v860 = vor.u32 4788187, %v859
    %v861 = vand.u32 2147483647, %v860
    %v863 = vcvt.s32.f32 %v856
    %v864 = vmul.f32 %v863, %v861
    %v865 = vxor.u32 %v864, 2147483648
    %v866 = vsel %vm783, %v865, %v864
    %v867 = vsub.s32 4, %v843
    %v868 = vsel %vm783, %v867, %v843
    %v869 = vsel %vm782, %v263, %v866
    %v870 = vsel %vm782, 0, %v868
    %v871 = vcosq.f32.pop %v869
    %v872 = vsinq.f32.pop %v869
    %vm873 = vweird.f32 %v263
    %v874 = vand.u32 %v870, 3
    %vm875 = vcmp.lt.s32.totalorder %v874, 2
    %vm876 = vcmp.eq.s32.totalorder %v874, 0
    %v877 = vxor.u32 %v872, 2147483648
    %v878 = vsel %vm876, %v871, %v877
    %vm879 = vcmp.eq.s32.totalorder %v874, 2
    %v880 = vxor.u32 %v871, 2147483648
    %v881 = vsel %vm879, %v880, %v872
    %v882 = vsel %vm875, %v878, %v881
    %v883 = vsel %vm873, nan, %v882
    %v884 = vand.u32 2147483647, %v264
    %vm885 = vcmp.le.f32.partialorder %v884, 0.7853982
    %vm886 = vcmp.lt.s32.totalorder %v264, 0
    %v887 = vand.u32 %v264, 2139095040
    %v888 = vshrl.u32 %v887, 23
    %v889 = vsub.s32 %v888, 127
    %v890 = vand.u32 2147483647, %v264
    %v891 = vand.u32 %v890, 8388607
    %v892 = vor.u32 %v891, 8388608
    %v893 = vsub.s32 0, %v892
    %v894 = vadd.s32 %v889, 1
    %vm895 = vcmp.gt.s32.totalorder %v894, 0
    %v896 = vsel %vm895, %v894, 0
    %v897 = vshrl.u32 %v896, 5
    %v898 = vand.u32 %v896, 31
    %v899 = vsub.s32 32, %v898
    %v900 = vshrl.u32 683565275, %v899
    %v901 = vshll.u32 683565275, %v898
    %v902 = vshrl.u32 2475754826, %v899
    %v903 = vor.u32 %v901, %v902
    %v904 = vshll.u32 2475754826, %v898
    %v905 = vshrl.u32 2131351028, %v899
    %v906 = vor.u32 %v904, %v905
    %v907 = vshll.u32 2131351028, %v898
    %v908 = vshrl.u32 2102212464, %v899
    %v909 = vor.u32 %v907, %v908
    %v910 = vshll.u32 2102212464, %v898
    %v911 = vshrl.u32 920167782, %v899
    %v912 = vor.u32 %v910, %v911
    %v913 = vshll.u32 920167782, %v898
    %v914 = vshrl.u32 1326507024, %v899
    %v915 = vor.u32 %v913, %v914
    %vm916 = vcmp.lt.s32.totalorder %v897, 1
    %vm917 = vcmp.lt.s32.totalorder %v897, 2
    %vm918 = vcmp.lt.s32.totalorder %v897, 3
    %vm919 = vcmp.lt.s32.totalorder %v897, 4
    %v920 = vsel %vm916, %v900, %v903
    %v921 = vsel %vm919, %v909, 2102212464
    %v922 = vsel %vm918, %v906, %v921
    %v923 = vsel %vm917, %v920, %v922
    %v924 = vsel %vm916, %v903, %v906
    %v925 = vsel %vm919, %v912, 920167782
    %v926 = vsel %vm918, %v909, %v925
    %v927 = vsel %vm917, %v924, %v926
    %v928 = vsel %vm916, %v906, %v909
    %v929 = vsel %vm919, %v915, 1326507024
    %v930 = vsel %vm918, %v912, %v929
    %v931 = vsel %vm917, %v928, %v930
    %v932 = vshll.u32 %v892, 8
    %v933 = vmul.u32.u64.compose %v932, %v931
    %v934 = vextract.low.u32 %v933
    %v935 = vextract.high.u32 %v933
    %v936 = vmul.u32.u64.compose %v932, %v927
    %v937 = vextract.low.u32 %v936
    %v938 = vextract.high.u32 %v936
    %v939 = vmul.u32 %v932, %v923
    %v940 = vadd.s32 %v935, %v937
    %vm941 = vc.u32 %v935, %v937
    %v942 = vadd.s32 %v938, 1
    %v943 = vsel %vm941, %v942, %v938
    %v944 = vadd.s32 %v939, %v943
    %v945 = vadd.s32 %v944, 536870912
    %v946 = vshrl.u32 %v945, 30
    %v947 = vshll.u32 %v946, 30
    %v948 = vsub.s32 %v944, %v947
    %vm949 = vcmp.lt.s32.totalorder %v948, 0
    %v950 = vsub.s32 0, %v948
    %v951 = vsel %vm949, %v950, %v948
    %v952 = vclz %v951
    %v953 = vsub.s32 %v952, 2
    %vm954 = vcmp.gt.s32.totalorder 0, %v953
    %v955 = vsel %vm954, 0, %v953
    %v956 = vsub.s32 32, %v955
    %v957 = vshll.u32 %v948, %v955
    %v958 = vshrl.u32 %v940, %v956
    %v959 = vor.u32 %v957, %v958
    %v960 = vsub.s32 4294967266, %v955
    %v961 = vadd.s32 %v960, 127
    %v962 = vshll.u32 %v961, 23
    %v963 = vor.u32 4788187, %v962
    %v964 = vand.u32 2147483647, %v963
    %v966 = vcvt.s32.f32 %v959
    %v967 = vmul.f32 %v966, %v964
    %v968 = vxor.u32 %v967, 2147483648
    %v969 = vsel %vm886, %v968, %v967
    %v970 = vsub.s32 4, %v946
    %v971 = vsel %vm886, %v970, %v946
    %v972 = vsel %vm885, %v264, %v969
    %v973 = vsel %vm885, 0, %v971
    %v974 = vcosq.f32.pop %v972
    %v975 = vsinq.f32.pop %v972
    %vm976 = vweird.f32 %v264
    %v977 = vand.u32 %v973, 3
    %vm978 = vcmp.lt.s32.totalorder %v977, 2
    %vm979 = vcmp.eq.s32.totalorder %v977, 0
    %v980 = vxor.u32 %v975, 2147483648
    %v981 = vsel %vm979, %v974, %v980
    %vm982 = vcmp.eq.s32.totalorder %v977, 2
    %v983 = vxor.u32 %v974, 2147483648
    %v984 = vsel %vm982, %v983, %v975
    %v985 = vsel %vm978, %v981, %v984
    %v986 = vsel %vm976, nan, %v985
    %v987 = vand.u32 2147483647, %v265
    %vm988 = vcmp.le.f32.partialorder %v987, 0.7853982
    %vm989 = vcmp.lt.s32.totalorder %v265, 0
    %v990 = vand.u32 %v265, 2139095040
    %v991 = vshrl.u32 %v990, 23
    %v992 = vsub.s32 %v991, 127
    %v993 = vand.u32 2147483647, %v265
    %v994 = vand.u32 %v993, 8388607
    %v995 = vor.u32 %v994, 8388608
    %v996 = vsub.s32 0, %v995
    %v997 = vadd.s32 %v992, 1
    %vm998 = vcmp.gt.s32.totalorder %v997, 0
    %v999 = vsel %vm998, %v997, 0
    %v1000 = vshrl.u32 %v999, 5
    %v1001 = vand.u32 %v999, 31
    %v1002 = vsub.s32 32, %v1001
    %v1003 = vshrl.u32 683565275, %v1002
    %v1004 = vshll.u32 683565275, %v1001
    %v1005 = vshrl.u32 2475754826, %v1002
    %v1006 = vor.u32 %v1004, %v1005
    %v1007 = vshll.u32 2475754826, %v1001
    %v1008 = vshrl.u32 2131351028, %v1002
    %v1009 = vor.u32 %v1007, %v1008
    %v1010 = vshll.u32 2131351028, %v1001
    %v1011 = vshrl.u32 2102212464, %v1002
    %v1012 = vor.u32 %v1010, %v1011
    %v1013 = vshll.u32 2102212464, %v1001
    %v1014 = vshrl.u32 920167782, %v1002
    %v1015 = vor.u32 %v1013, %v1014
    %v1016 = vshll.u32 920167782, %v1001
    %v1017 = vshrl.u32 1326507024, %v1002
    %v1018 = vor.u32 %v1016, %v1017
    %vm1019 = vcmp.lt.s32.totalorder %v1000, 1
    %vm1020 = vcmp.lt.s32.totalorder %v1000, 2
    %vm1021 = vcmp.lt.s32.totalorder %v1000, 3
    %vm1022 = vcmp.lt.s32.totalorder %v1000, 4
    %v1023 = vsel %vm1019, %v1003, %v1006
    %v1024 = vsel %vm1022, %v1012, 2102212464
    %v1025 = vsel %vm1021, %v1009, %v1024
    %v1026 = vsel %vm1020, %v1023, %v1025
    %v1027 = vsel %vm1019, %v1006, %v1009
    %v1028 = vsel %vm1022, %v1015, 920167782
    %v1029 = vsel %vm1021, %v1012, %v1028
    %v1030 = vsel %vm1020, %v1027, %v1029
    %v1031 = vsel %vm1019, %v1009, %v1012
    %v1032 = vsel %vm1022, %v1018, 1326507024
    %v1033 = vsel %vm1021, %v1015, %v1032
    %v1034 = vsel %vm1020, %v1031, %v1033
    %v1035 = vshll.u32 %v995, 8
    %v1036 = vmul.u32.u64.compose %v1035, %v1034
    %v1037 = vextract.low.u32 %v1036
    %v1038 = vextract.high.u32 %v1036
    %v1039 = vmul.u32.u64.compose %v1035, %v1030
    %v1040 = vextract.low.u32 %v1039
    %v1041 = vextract.high.u32 %v1039
    %v1042 = vmul.u32 %v1035, %v1026
    %v1043 = vadd.s32 %v1038, %v1040
    %vm1044 = vc.u32 %v1038, %v1040
    %v1045 = vadd.s32 %v1041, 1
    %v1046 = vsel %vm1044, %v1045, %v1041
    %v1047 = vadd.s32 %v1042, %v1046
    %v1048 = vadd.s32 %v1047, 536870912
    %v1049 = vshrl.u32 %v1048, 30
    %v1050 = vshll.u32 %v1049, 30
    %v1051 = vsub.s32 %v1047, %v1050
    %vm1052 = vcmp.lt.s32.totalorder %v1051, 0
    %v1053 = vsub.s32 0, %v1051
    %v1054 = vsel %vm1052, %v1053, %v1051
    %v1055 = vclz %v1054
    %v1056 = vsub.s32 %v1055, 2
    %vm1057 = vcmp.gt.s32.totalorder 0, %v1056
    %v1058 = vsel %vm1057, 0, %v1056
    %v1059 = vsub.s32 32, %v1058
    %v1060 = vshll.u32 %v1051, %v1058
    %v1061 = vshrl.u32 %v1043, %v1059
    %v1062 = vor.u32 %v1060, %v1061
    %v1063 = vsub.s32 4294967266, %v1058
    %v1064 = vadd.s32 %v1063, 127
    %v1065 = vshll.u32 %v1064, 23
    %v1066 = vor.u32 4788187, %v1065
    %v1067 = vand.u32 2147483647, %v1066
    %v1069 = vcvt.s32.f32 %v1062
    %v1070 = vmul.f32 %v1069, %v1067
    %v1071 = vxor.u32 %v1070, 2147483648
    %v1072 = vsel %vm989, %v1071, %v1070
    %v1073 = vsub.s32 4, %v1049
    %v1074 = vsel %vm989, %v1073, %v1049
    %v1075 = vsel %vm988, %v265, %v1072
    %v1076 = vsel %vm988, 0, %v1074
    %v1077 = vcosq.f32.pop %v1075
    %v1078 = vsinq.f32.pop %v1075
    %vm1079 = vweird.f32 %v265
    %v1080 = vand.u32 %v1076, 3
    %vm1081 = vcmp.lt.s32.totalorder %v1080, 2
    %vm1082 = vcmp.eq.s32.totalorder %v1080, 0
    %v1083 = vxor.u32 %v1078, 2147483648
    %v1084 = vsel %vm1082, %v1077, %v1083
    %vm1085 = vcmp.eq.s32.totalorder %v1080, 2
    %v1086 = vxor.u32 %v1077, 2147483648
    %v1087 = vsel %vm1085, %v1086, %v1078
    %v1088 = vsel %vm1081, %v1084, %v1087
    %v1089 = vsel %vm1079, nan, %v1088
    %v1090 = vmul.f32 %v208, %v368
    %v1091 = vmul.f32 %v215, %v471
    %v1092 = vmul.f32 %v222, %v574
    %v1093 = vmul.f32 %v229, %v677
    %v1094 = vmul.f32 %v236, %v780
    %v1095 = vmul.f32 %v243, %v883
    %v1096 = vmul.f32 %v250, %v986
    %v1097 = vmul.f32 %v257, %v1089
    %v1098 = vand.u32 2147483647, %v258
    %vm1099 = vcmp.le.f32.partialorder %v1098, 0.7853982
    %vm1100 = vcmp.lt.s32.totalorder %v258, 0
    %v1101 = vand.u32 %v258, 2139095040
    %v1102 = vshrl.u32 %v1101, 23
    %v1103 = vsub.s32 %v1102, 127
    %v1104 = vand.u32 2147483647, %v258
    %v1105 = vand.u32 %v1104, 8388607
    %v1106 = vor.u32 %v1105, 8388608
    %v1107 = vsub.s32 0, %v1106
    %v1108 = vadd.s32 %v1103, 1
    %vm1109 = vcmp.gt.s32.totalorder %v1108, 0
    %v1110 = vsel %vm1109, %v1108, 0
    %v1111 = vshrl.u32 %v1110, 5
    %v1112 = vand.u32 %v1110, 31
    %v1113 = vsub.s32 32, %v1112
    %v1114 = vshrl.u32 683565275, %v1113
    %v1115 = vshll.u32 683565275, %v1112
    %v1116 = vshrl.u32 2475754826, %v1113
    %v1117 = vor.u32 %v1115, %v1116
    %v1118 = vshll.u32 2475754826, %v1112
    %v1119 = vshrl.u32 2131351028, %v1113
    %v1120 = vor.u32 %v1118, %v1119
    %v1121 = vshll.u32 2131351028, %v1112
    %v1122 = vshrl.u32 2102212464, %v1113
    %v1123 = vor.u32 %v1121, %v1122
    %v1124 = vshll.u32 2102212464, %v1112
    %v1125 = vshrl.u32 920167782, %v1113
    %v1126 = vor.u32 %v1124, %v1125
    %v1127 = vshll.u32 920167782, %v1112
    %v1128 = vshrl.u32 1326507024, %v1113
    %v1129 = vor.u32 %v1127, %v1128
    %vm1130 = vcmp.lt.s32.totalorder %v1111, 1
    %vm1131 = vcmp.lt.s32.totalorder %v1111, 2
    %vm1132 = vcmp.lt.s32.totalorder %v1111, 3
    %vm1133 = vcmp.lt.s32.totalorder %v1111, 4
    %v1134 = vsel %vm1130, %v1114, %v1117
    %v1135 = vsel %vm1133, %v1123, 2102212464
    %v1136 = vsel %vm1132, %v1120, %v1135
    %v1137 = vsel %vm1131, %v1134, %v1136
    %v1138 = vsel %vm1130, %v1117, %v1120
    %v1139 = vsel %vm1133, %v1126, 920167782
    %v1140 = vsel %vm1132, %v1123, %v1139
    %v1141 = vsel %vm1131, %v1138, %v1140
    %v1142 = vsel %vm1130, %v1120, %v1123
    %v1143 = vsel %vm1133, %v1129, 1326507024
    %v1144 = vsel %vm1132, %v1126, %v1143
    %v1145 = vsel %vm1131, %v1142, %v1144
    %v1146 = vshll.u32 %v1106, 8
    %v1147 = vmul.u32.u64.compose %v1146, %v1145
    %v1148 = vextract.low.u32 %v1147
    %v1149 = vextract.high.u32 %v1147
    %v1150 = vmul.u32.u64.compose %v1146, %v1141
    %v1151 = vextract.low.u32 %v1150
    %v1152 = vextract.high.u32 %v1150
    %v1153 = vmul.u32 %v1146, %v1137
    %v1154 = vadd.s32 %v1149, %v1151
    %vm1155 = vc.u32 %v1149, %v1151
    %v1156 = vadd.s32 %v1152, 1
    %v1157 = vsel %vm1155, %v1156, %v1152
    %v1158 = vadd.s32 %v1153, %v1157
    %v1159 = vadd.s32 %v1158, 536870912
    %v1160 = vshrl.u32 %v1159, 30
    %v1161 = vshll.u32 %v1160, 30
    %v1162 = vsub.s32 %v1158, %v1161
    %vm1163 = vcmp.lt.s32.totalorder %v1162, 0
    %v1164 = vsub.s32 0, %v1162
    %v1165 = vsel %vm1163, %v1164, %v1162
    %v1166 = vclz %v1165
    %v1167 = vsub.s32 %v1166, 2
    %vm1168 = vcmp.gt.s32.totalorder 0, %v1167
    %v1169 = vsel %vm1168, 0, %v1167
    %v1170 = vsub.s32 32, %v1169
    %v1171 = vshll.u32 %v1162, %v1169
    %v1172 = vshrl.u32 %v1154, %v1170
    %v1173 = vor.u32 %v1171, %v1172
    %v1174 = vsub.s32 4294967266, %v1169
    %v1175 = vadd.s32 %v1174, 127
    %v1176 = vshll.u32 %v1175, 23
    %v1177 = vor.u32 4788187, %v1176
    %v1178 = vand.u32 2147483647, %v1177
    %v1180 = vcvt.s32.f32 %v1173
    %v1181 = vmul.f32 %v1180, %v1178
    %v1182 = vxor.u32 %v1181, 2147483648
    %v1183 = vsel %vm1100, %v1182, %v1181
    %v1184 = vsub.s32 4, %v1160
    %v1185 = vsel %vm1100, %v1184, %v1160
    %v1186 = vsel %vm1099, %v258, %v1183
    %v1187 = vsel %vm1099, 0, %v1185
    %v1188 = vcosq.f32.pop %v1186
    %v1189 = vsinq.f32.pop %v1186
    %vm1190 = vweird.f32 %v258
    %v1191 = vadd.s32 %v1187, 3
    %v1192 = vand.u32 %v1191, 3
    %vm1193 = vcmp.lt.s32.totalorder %v1192, 2
    %vm1194 = vcmp.eq.s32.totalorder %v1192, 0
    %v1195 = vxor.u32 %v1189, 2147483648
    %v1196 = vsel %vm1194, %v1188, %v1195
    %vm1197 = vcmp.eq.s32.totalorder %v1192, 2
    %v1198 = vxor.u32 %v1188, 2147483648
    %v1199 = vsel %vm1197, %v1198, %v1189
    %v1200 = vsel %vm1193, %v1196, %v1199
    %v1201 = vsel %vm1190, nan, %v1200
    %v1202 = vand.u32 2147483647, %v259
    %vm1203 = vcmp.le.f32.partialorder %v1202, 0.7853982
    %vm1204 = vcmp.lt.s32.totalorder %v259, 0
    %v1205 = vand.u32 %v259, 2139095040
    %v1206 = vshrl.u32 %v1205, 23
    %v1207 = vsub.s32 %v1206, 127
    %v1208 = vand.u32 2147483647, %v259
    %v1209 = vand.u32 %v1208, 8388607
    %v1210 = vor.u32 %v1209, 8388608
    %v1211 = vsub.s32 0, %v1210
    %v1212 = vadd.s32 %v1207, 1
    %vm1213 = vcmp.gt.s32.totalorder %v1212, 0
    %v1214 = vsel %vm1213, %v1212, 0
    %v1215 = vshrl.u32 %v1214, 5
    %v1216 = vand.u32 %v1214, 31
    %v1217 = vsub.s32 32, %v1216
    %v1218 = vshrl.u32 683565275, %v1217
    %v1219 = vshll.u32 683565275, %v1216
    %v1220 = vshrl.u32 2475754826, %v1217
    %v1221 = vor.u32 %v1219, %v1220
    %v1222 = vshll.u32 2475754826, %v1216
    %v1223 = vshrl.u32 2131351028, %v1217
    %v1224 = vor.u32 %v1222, %v1223
    %v1225 = vshll.u32 2131351028, %v1216
    %v1226 = vshrl.u32 2102212464, %v1217
    %v1227 = vor.u32 %v1225, %v1226
    %v1228 = vshll.u32 2102212464, %v1216
    %v1229 = vshrl.u32 920167782, %v1217
    %v1230 = vor.u32 %v1228, %v1229
    %v1231 = vshll.u32 920167782, %v1216
    %v1232 = vshrl.u32 1326507024, %v1217
    %v1233 = vor.u32 %v1231, %v1232
    %vm1234 = vcmp.lt.s32.totalorder %v1215, 1
    %vm1235 = vcmp.lt.s32.totalorder %v1215, 2
    %vm1236 = vcmp.lt.s32.totalorder %v1215, 3
    %vm1237 = vcmp.lt.s32.totalorder %v1215, 4
    %v1238 = vsel %vm1234, %v1218, %v1221
    %v1239 = vsel %vm1237, %v1227, 2102212464
    %v1240 = vsel %vm1236, %v1224, %v1239
    %v1241 = vsel %vm1235, %v1238, %v1240
    %v1242 = vsel %vm1234, %v1221, %v1224
    %v1243 = vsel %vm1237, %v1230, 920167782
    %v1244 = vsel %vm1236, %v1227, %v1243
    %v1245 = vsel %vm1235, %v1242, %v1244
    %v1246 = vsel %vm1234, %v1224, %v1227
    %v1247 = vsel %vm1237, %v1233, 1326507024
    %v1248 = vsel %vm1236, %v1230, %v1247
    %v1249 = vsel %vm1235, %v1246, %v1248
    %v1250 = vshll.u32 %v1210, 8
    %v1251 = vmul.u32.u64.compose %v1250, %v1249
    %v1252 = vextract.low.u32 %v1251
    %v1253 = vextract.high.u32 %v1251
    %v1254 = vmul.u32.u64.compose %v1250, %v1245
    %v1255 = vextract.low.u32 %v1254
    %v1256 = vextract.high.u32 %v1254
    %v1257 = vmul.u32 %v1250, %v1241
    %v1258 = vadd.s32 %v1253, %v1255
    %vm1259 = vc.u32 %v1253, %v1255
    %v1260 = vadd.s32 %v1256, 1
    %v1261 = vsel %vm1259, %v1260, %v1256
    %v1262 = vadd.s32 %v1257, %v1261
    %v1263 = vadd.s32 %v1262, 536870912
    %v1264 = vshrl.u32 %v1263, 30
    %v1265 = vshll.u32 %v1264, 30
    %v1266 = vsub.s32 %v1262, %v1265
    %vm1267 = vcmp.lt.s32.totalorder %v1266, 0
    %v1268 = vsub.s32 0, %v1266
    %v1269 = vsel %vm1267, %v1268, %v1266
    %v1270 = vclz %v1269
    %v1271 = vsub.s32 %v1270, 2
    %vm1272 = vcmp.gt.s32.totalorder 0, %v1271
    %v1273 = vsel %vm1272, 0, %v1271
    %v1274 = vsub.s32 32, %v1273
    %v1275 = vshll.u32 %v1266, %v1273
    %v1276 = vshrl.u32 %v1258, %v1274
    %v1277 = vor.u32 %v1275, %v1276
    %v1278 = vsub.s32 4294967266, %v1273
    %v1279 = vadd.s32 %v1278, 127
    %v1280 = vshll.u32 %v1279, 23
    %v1281 = vor.u32 4788187, %v1280
    %v1282 = vand.u32 2147483647, %v1281
    %v1284 = vcvt.s32.f32 %v1277
    %v1285 = vmul.f32 %v1284, %v1282
    %v1286 = vxor.u32 %v1285, 2147483648
    %v1287 = vsel %vm1204, %v1286, %v1285
    %v1288 = vsub.s32 4, %v1264
    %v1289 = vsel %vm1204, %v1288, %v1264
    %v1290 = vsel %vm1203, %v259, %v1287
    %v1291 = vsel %vm1203, 0, %v1289
    %v1292 = vcosq.f32.pop %v1290
    %v1293 = vsinq.f32.pop %v1290
    %vm1294 = vweird.f32 %v259
    %v1295 = vadd.s32 %v1291, 3
    %v1296 = vand.u32 %v1295, 3
    %vm1297 = vcmp.lt.s32.totalorder %v1296, 2
    %vm1298 = vcmp.eq.s32.totalorder %v1296, 0
    %v1299 = vxor.u32 %v1293, 2147483648
    %v1300 = vsel %vm1298, %v1292, %v1299
    %vm1301 = vcmp.eq.s32.totalorder %v1296, 2
    %v1302 = vxor.u32 %v1292, 2147483648
    %v1303 = vsel %vm1301, %v1302, %v1293
    %v1304 = vsel %vm1297, %v1300, %v1303
    %v1305 = vsel %vm1294, nan, %v1304
    %v1306 = vand.u32 2147483647, %v260
    %vm1307 = vcmp.le.f32.partialorder %v1306, 0.7853982
    %vm1308 = vcmp.lt.s32.totalorder %v260, 0
    %v1309 = vand.u32 %v260, 2139095040
    %v1310 = vshrl.u32 %v1309, 23
    %v1311 = vsub.s32 %v1310, 127
    %v1312 = vand.u32 2147483647, %v260
    %v1313 = vand.u32 %v1312, 8388607
    %v1314 = vor.u32 %v1313, 8388608
    %v1315 = vsub.s32 0, %v1314
    %v1316 = vadd.s32 %v1311, 1
    %vm1317 = vcmp.gt.s32.totalorder %v1316, 0
    %v1318 = vsel %vm1317, %v1316, 0
    %v1319 = vshrl.u32 %v1318, 5
    %v1320 = vand.u32 %v1318, 31
    %v1321 = vsub.s32 32, %v1320
    %v1322 = vshrl.u32 683565275, %v1321
    %v1323 = vshll.u32 683565275, %v1320
    %v1324 = vshrl.u32 2475754826, %v1321
    %v1325 = vor.u32 %v1323, %v1324
    %v1326 = vshll.u32 2475754826, %v1320
    %v1327 = vshrl.u32 2131351028, %v1321
    %v1328 = vor.u32 %v1326, %v1327
    %v1329 = vshll.u32 2131351028, %v1320
    %v1330 = vshrl.u32 2102212464, %v1321
    %v1331 = vor.u32 %v1329, %v1330
    %v1332 = vshll.u32 2102212464, %v1320
    %v1333 = vshrl.u32 920167782, %v1321
    %v1334 = vor.u32 %v1332, %v1333
    %v1335 = vshll.u32 920167782, %v1320
    %v1336 = vshrl.u32 1326507024, %v1321
    %v1337 = vor.u32 %v1335, %v1336
    %vm1338 = vcmp.lt.s32.totalorder %v1319, 1
    %vm1339 = vcmp.lt.s32.totalorder %v1319, 2
    %vm1340 = vcmp.lt.s32.totalorder %v1319, 3
    %vm1341 = vcmp.lt.s32.totalorder %v1319, 4
    %v1342 = vsel %vm1338, %v1322, %v1325
    %v1343 = vsel %vm1341, %v1331, 2102212464
    %v1344 = vsel %vm1340, %v1328, %v1343
    %v1345 = vsel %vm1339, %v1342, %v1344
    %v1346 = vsel %vm1338, %v1325, %v1328
    %v1347 = vsel %vm1341, %v1334, 920167782
    %v1348 = vsel %vm1340, %v1331, %v1347
    %v1349 = vsel %vm1339, %v1346, %v1348
    %v1350 = vsel %vm1338, %v1328, %v1331
    %v1351 = vsel %vm1341, %v1337, 1326507024
    %v1352 = vsel %vm1340, %v1334, %v1351
    %v1353 = vsel %vm1339, %v1350, %v1352
    %v1354 = vshll.u32 %v1314, 8
    %v1355 = vmul.u32.u64.compose %v1354, %v1353
    %v1356 = vextract.low.u32 %v1355
    %v1357 = vextract.high.u32 %v1355
    %v1358 = vmul.u32.u64.compose %v1354, %v1349
    %v1359 = vextract.low.u32 %v1358
    %v1360 = vextract.high.u32 %v1358
    %v1361 = vmul.u32 %v1354, %v1345
    %v1362 = vadd.s32 %v1357, %v1359
    %vm1363 = vc.u32 %v1357, %v1359
    %v1364 = vadd.s32 %v1360, 1
    %v1365 = vsel %vm1363, %v1364, %v1360
    %v1366 = vadd.s32 %v1361, %v1365
    %v1367 = vadd.s32 %v1366, 536870912
    %v1368 = vshrl.u32 %v1367, 30
    %v1369 = vshll.u32 %v1368, 30
    %v1370 = vsub.s32 %v1366, %v1369
    %vm1371 = vcmp.lt.s32.totalorder %v1370, 0
    %v1372 = vsub.s32 0, %v1370
    %v1373 = vsel %vm1371, %v1372, %v1370
    %v1374 = vclz %v1373
    %v1375 = vsub.s32 %v1374, 2
    %vm1376 = vcmp.gt.s32.totalorder 0, %v1375
    %v1377 = vsel %vm1376, 0, %v1375
    %v1378 = vsub.s32 32, %v1377
    %v1379 = vshll.u32 %v1370, %v1377
    %v1380 = vshrl.u32 %v1362, %v1378
    %v1381 = vor.u32 %v1379, %v1380
    %v1382 = vsub.s32 4294967266, %v1377
    %v1383 = vadd.s32 %v1382, 127
    %v1384 = vshll.u32 %v1383, 23
    %v1385 = vor.u32 4788187, %v1384
    %v1386 = vand.u32 2147483647, %v1385
    %v1388 = vcvt.s32.f32 %v1381
    %v1389 = vmul.f32 %v1388, %v1386
    %v1390 = vxor.u32 %v1389, 2147483648
    %v1391 = vsel %vm1308, %v1390, %v1389
    %v1392 = vsub.s32 4, %v1368
    %v1393 = vsel %vm1308, %v1392, %v1368
    %v1394 = vsel %vm1307, %v260, %v1391
    %v1395 = vsel %vm1307, 0, %v1393
    %v1396 = vcosq.f32.pop %v1394
    %v1397 = vsinq.f32.pop %v1394
    %vm1398 = vweird.f32 %v260
    %v1399 = vadd.s32 %v1395, 3
    %v1400 = vand.u32 %v1399, 3
    %vm1401 = vcmp.lt.s32.totalorder %v1400, 2
    %vm1402 = vcmp.eq.s32.totalorder %v1400, 0
    %v1403 = vxor.u32 %v1397, 2147483648
    %v1404 = vsel %vm1402, %v1396, %v1403
    %vm1405 = vcmp.eq.s32.totalorder %v1400, 2
    %v1406 = vxor.u32 %v1396, 2147483648
    %v1407 = vsel %vm1405, %v1406, %v1397
    %v1408 = vsel %vm1401, %v1404, %v1407
    %v1409 = vsel %vm1398, nan, %v1408
    %v1410 = vand.u32 2147483647, %v261
    %vm1411 = vcmp.le.f32.partialorder %v1410, 0.7853982
    %vm1412 = vcmp.lt.s32.totalorder %v261, 0
    %v1413 = vand.u32 %v261, 2139095040
    %v1414 = vshrl.u32 %v1413, 23
    %v1415 = vsub.s32 %v1414, 127
    %v1416 = vand.u32 2147483647, %v261
    %v1417 = vand.u32 %v1416, 8388607
    %v1418 = vor.u32 %v1417, 8388608
    %v1419 = vsub.s32 0, %v1418
    %v1420 = vadd.s32 %v1415, 1
    %vm1421 = vcmp.gt.s32.totalorder %v1420, 0
    %v1422 = vsel %vm1421, %v1420, 0
    %v1423 = vshrl.u32 %v1422, 5
    %v1424 = vand.u32 %v1422, 31
    %v1425 = vsub.s32 32, %v1424
    %v1426 = vshrl.u32 683565275, %v1425
    %v1427 = vshll.u32 683565275, %v1424
    %v1428 = vshrl.u32 2475754826, %v1425
    %v1429 = vor.u32 %v1427, %v1428
    %v1430 = vshll.u32 2475754826, %v1424
    %v1431 = vshrl.u32 2131351028, %v1425
    %v1432 = vor.u32 %v1430, %v1431
    %v1433 = vshll.u32 2131351028, %v1424
    %v1434 = vshrl.u32 2102212464, %v1425
    %v1435 = vor.u32 %v1433, %v1434
    %v1436 = vshll.u32 2102212464, %v1424
    %v1437 = vshrl.u32 920167782, %v1425
    %v1438 = vor.u32 %v1436, %v1437
    %v1439 = vshll.u32 920167782, %v1424
    %v1440 = vshrl.u32 1326507024, %v1425
    %v1441 = vor.u32 %v1439, %v1440
    %vm1442 = vcmp.lt.s32.totalorder %v1423, 1
    %vm1443 = vcmp.lt.s32.totalorder %v1423, 2
    %vm1444 = vcmp.lt.s32.totalorder %v1423, 3
    %vm1445 = vcmp.lt.s32.totalorder %v1423, 4
    %v1446 = vsel %vm1442, %v1426, %v1429
    %v1447 = vsel %vm1445, %v1435, 2102212464
    %v1448 = vsel %vm1444, %v1432, %v1447
    %v1449 = vsel %vm1443, %v1446, %v1448
    %v1450 = vsel %vm1442, %v1429, %v1432
    %v1451 = vsel %vm1445, %v1438, 920167782
    %v1452 = vsel %vm1444, %v1435, %v1451
    %v1453 = vsel %vm1443, %v1450, %v1452
    %v1454 = vsel %vm1442, %v1432, %v1435
    %v1455 = vsel %vm1445, %v1441, 1326507024
    %v1456 = vsel %vm1444, %v1438, %v1455
    %v1457 = vsel %vm1443, %v1454, %v1456
    %v1458 = vshll.u32 %v1418, 8
    %v1459 = vmul.u32.u64.compose %v1458, %v1457
    %v1460 = vextract.low.u32 %v1459
    %v1461 = vextract.high.u32 %v1459
    %v1462 = vmul.u32.u64.compose %v1458, %v1453
    %v1463 = vextract.low.u32 %v1462
    %v1464 = vextract.high.u32 %v1462
    %v1465 = vmul.u32 %v1458, %v1449
    %v1466 = vadd.s32 %v1461, %v1463
    %vm1467 = vc.u32 %v1461, %v1463
    %v1468 = vadd.s32 %v1464, 1
    %v1469 = vsel %vm1467, %v1468, %v1464
    %v1470 = vadd.s32 %v1465, %v1469
    %v1471 = vadd.s32 %v1470, 536870912
    %v1472 = vshrl.u32 %v1471, 30
    %v1473 = vshll.u32 %v1472, 30
    %v1474 = vsub.s32 %v1470, %v1473
    %vm1475 = vcmp.lt.s32.totalorder %v1474, 0
    %v1476 = vsub.s32 0, %v1474
    %v1477 = vsel %vm1475, %v1476, %v1474
    %v1478 = vclz %v1477
    %v1479 = vsub.s32 %v1478, 2
    %vm1480 = vcmp.gt.s32.totalorder 0, %v1479
    %v1481 = vsel %vm1480, 0, %v1479
    %v1482 = vsub.s32 32, %v1481
    %v1483 = vshll.u32 %v1474, %v1481
    %v1484 = vshrl.u32 %v1466, %v1482
    %v1485 = vor.u32 %v1483, %v1484
    %v1486 = vsub.s32 4294967266, %v1481
    %v1487 = vadd.s32 %v1486, 127
    %v1488 = vshll.u32 %v1487, 23
    %v1489 = vor.u32 4788187, %v1488
    %v1490 = vand.u32 2147483647, %v1489
    %v1492 = vcvt.s32.f32 %v1485
    %v1493 = vmul.f32 %v1492, %v1490
    %v1494 = vxor.u32 %v1493, 2147483648
    %v1495 = vsel %vm1412, %v1494, %v1493
    %v1496 = vsub.s32 4, %v1472
    %v1497 = vsel %vm1412, %v1496, %v1472
    %v1498 = vsel %vm1411, %v261, %v1495
    %v1499 = vsel %vm1411, 0, %v1497
    %v1500 = vcosq.f32.pop %v1498
    %v1501 = vsinq.f32.pop %v1498
    %vm1502 = vweird.f32 %v261
    %v1503 = vadd.s32 %v1499, 3
    %v1504 = vand.u32 %v1503, 3
    %vm1505 = vcmp.lt.s32.totalorder %v1504, 2
    %vm1506 = vcmp.eq.s32.totalorder %v1504, 0
    %v1507 = vxor.u32 %v1501, 2147483648
    %v1508 = vsel %vm1506, %v1500, %v1507
    %vm1509 = vcmp.eq.s32.totalorder %v1504, 2
    %v1510 = vxor.u32 %v1500, 2147483648
    %v1511 = vsel %vm1509, %v1510, %v1501
    %v1512 = vsel %vm1505, %v1508, %v1511
    %v1513 = vsel %vm1502, nan, %v1512
    %v1514 = vand.u32 2147483647, %v262
    %vm1515 = vcmp.le.f32.partialorder %v1514, 0.7853982
    %vm1516 = vcmp.lt.s32.totalorder %v262, 0
    %v1517 = vand.u32 %v262, 2139095040
    %v1518 = vshrl.u32 %v1517, 23
    %v1519 = vsub.s32 %v1518, 127
    %v1520 = vand.u32 2147483647, %v262
    %v1521 = vand.u32 %v1520, 8388607
    %v1522 = vor.u32 %v1521, 8388608
    %v1523 = vsub.s32 0, %v1522
    %v1524 = vadd.s32 %v1519, 1
    %vm1525 = vcmp.gt.s32.totalorder %v1524, 0
    %v1526 = vsel %vm1525, %v1524, 0
    %v1527 = vshrl.u32 %v1526, 5
    %v1528 = vand.u32 %v1526, 31
    %v1529 = vsub.s32 32, %v1528
    %v1530 = vshrl.u32 683565275, %v1529
    %v1531 = vshll.u32 683565275, %v1528
    %v1532 = vshrl.u32 2475754826, %v1529
    %v1533 = vor.u32 %v1531, %v1532
    %v1534 = vshll.u32 2475754826, %v1528
    %v1535 = vshrl.u32 2131351028, %v1529
    %v1536 = vor.u32 %v1534, %v1535
    %v1537 = vshll.u32 2131351028, %v1528
    %v1538 = vshrl.u32 2102212464, %v1529
    %v1539 = vor.u32 %v1537, %v1538
    %v1540 = vshll.u32 2102212464, %v1528
    %v1541 = vshrl.u32 920167782, %v1529
    %v1542 = vor.u32 %v1540, %v1541
    %v1543 = vshll.u32 920167782, %v1528
    %v1544 = vshrl.u32 1326507024, %v1529
    %v1545 = vor.u32 %v1543, %v1544
    %vm1546 = vcmp.lt.s32.totalorder %v1527, 1
    %vm1547 = vcmp.lt.s32.totalorder %v1527, 2
    %vm1548 = vcmp.lt.s32.totalorder %v1527, 3
    %vm1549 = vcmp.lt.s32.totalorder %v1527, 4
    %v1550 = vsel %vm1546, %v1530, %v1533
    %v1551 = vsel %vm1549, %v1539, 2102212464
    %v1552 = vsel %vm1548, %v1536, %v1551
    %v1553 = vsel %vm1547, %v1550, %v1552
    %v1554 = vsel %vm1546, %v1533, %v1536
    %v1555 = vsel %vm1549, %v1542, 920167782
    %v1556 = vsel %vm1548, %v1539, %v1555
    %v1557 = vsel %vm1547, %v1554, %v1556
    %v1558 = vsel %vm1546, %v1536, %v1539
    %v1559 = vsel %vm1549, %v1545, 1326507024
    %v1560 = vsel %vm1548, %v1542, %v1559
    %v1561 = vsel %vm1547, %v1558, %v1560
    %v1562 = vshll.u32 %v1522, 8
    %v1563 = vmul.u32.u64.compose %v1562, %v1561
    %v1564 = vextract.low.u32 %v1563
    %v1565 = vextract.high.u32 %v1563
    %v1566 = vmul.u32.u64.compose %v1562, %v1557
    %v1567 = vextract.low.u32 %v1566
    %v1568 = vextract.high.u32 %v1566
    %v1569 = vmul.u32 %v1562, %v1553
    %v1570 = vadd.s32 %v1565, %v1567
    %vm1571 = vc.u32 %v1565, %v1567
    %v1572 = vadd.s32 %v1568, 1
    %v1573 = vsel %vm1571, %v1572, %v1568
    %v1574 = vadd.s32 %v1569, %v1573
    %v1575 = vadd.s32 %v1574, 536870912
    %v1576 = vshrl.u32 %v1575, 30
    %v1577 = vshll.u32 %v1576, 30
    %v1578 = vsub.s32 %v1574, %v1577
    %vm1579 = vcmp.lt.s32.totalorder %v1578, 0
    %v1580 = vsub.s32 0, %v1578
    %v1581 = vsel %vm1579, %v1580, %v1578
    %v1582 = vclz %v1581
    %v1583 = vsub.s32 %v1582, 2
    %vm1584 = vcmp.gt.s32.totalorder 0, %v1583
    %v1585 = vsel %vm1584, 0, %v1583
    %v1586 = vsub.s32 32, %v1585
    %v1587 = vshll.u32 %v1578, %v1585
    %v1588 = vshrl.u32 %v1570, %v1586
    %v1589 = vor.u32 %v1587, %v1588
    %v1590 = vsub.s32 4294967266, %v1585
    %v1591 = vadd.s32 %v1590, 127
    %v1592 = vshll.u32 %v1591, 23
    %v1593 = vor.u32 4788187, %v1592
    %v1594 = vand.u32 2147483647, %v1593
    %v1596 = vcvt.s32.f32 %v1589
    %v1597 = vmul.f32 %v1596, %v1594
    %v1598 = vxor.u32 %v1597, 2147483648
    %v1599 = vsel %vm1516, %v1598, %v1597
    %v1600 = vsub.s32 4, %v1576
    %v1601 = vsel %vm1516, %v1600, %v1576
    %v1602 = vsel %vm1515, %v262, %v1599
    %v1603 = vsel %vm1515, 0, %v1601
    %v1604 = vcosq.f32.pop %v1602
    %v1605 = vsinq.f32.pop %v1602
    %vm1606 = vweird.f32 %v262
    %v1607 = vadd.s32 %v1603, 3
    %v1608 = vand.u32 %v1607, 3
    %vm1609 = vcmp.lt.s32.totalorder %v1608, 2
    %vm1610 = vcmp.eq.s32.totalorder %v1608, 0
    %v1611 = vxor.u32 %v1605, 2147483648
    %v1612 = vsel %vm1610, %v1604, %v1611
    %vm1613 = vcmp.eq.s32.totalorder %v1608, 2
    %v1614 = vxor.u32 %v1604, 2147483648
    %v1615 = vsel %vm1613, %v1614, %v1605
    %v1616 = vsel %vm1609, %v1612, %v1615
    %v1617 = vsel %vm1606, nan, %v1616
    %v1618 = vand.u32 2147483647, %v263
    %vm1619 = vcmp.le.f32.partialorder %v1618, 0.7853982
    %vm1620 = vcmp.lt.s32.totalorder %v263, 0
    %v1621 = vand.u32 %v263, 2139095040
    %v1622 = vshrl.u32 %v1621, 23
    %v1623 = vsub.s32 %v1622, 127
    %v1624 = vand.u32 2147483647, %v263
    %v1625 = vand.u32 %v1624, 8388607
    %v1626 = vor.u32 %v1625, 8388608
    %v1627 = vsub.s32 0, %v1626
    %v1628 = vadd.s32 %v1623, 1
    %vm1629 = vcmp.gt.s32.totalorder %v1628, 0
    %v1630 = vsel %vm1629, %v1628, 0
    %v1631 = vshrl.u32 %v1630, 5
    %v1632 = vand.u32 %v1630, 31
    %v1633 = vsub.s32 32, %v1632
    %v1634 = vshrl.u32 683565275, %v1633
    %v1635 = vshll.u32 683565275, %v1632
    %v1636 = vshrl.u32 2475754826, %v1633
    %v1637 = vor.u32 %v1635, %v1636
    %v1638 = vshll.u32 2475754826, %v1632
    %v1639 = vshrl.u32 2131351028, %v1633
    %v1640 = vor.u32 %v1638, %v1639
    %v1641 = vshll.u32 2131351028, %v1632
    %v1642 = vshrl.u32 2102212464, %v1633
    %v1643 = vor.u32 %v1641, %v1642
    %v1644 = vshll.u32 2102212464, %v1632
    %v1645 = vshrl.u32 920167782, %v1633
    %v1646 = vor.u32 %v1644, %v1645
    %v1647 = vshll.u32 920167782, %v1632
    %v1648 = vshrl.u32 1326507024, %v1633
    %v1649 = vor.u32 %v1647, %v1648
    %vm1650 = vcmp.lt.s32.totalorder %v1631, 1
    %vm1651 = vcmp.lt.s32.totalorder %v1631, 2
    %vm1652 = vcmp.lt.s32.totalorder %v1631, 3
    %vm1653 = vcmp.lt.s32.totalorder %v1631, 4
    %v1654 = vsel %vm1650, %v1634, %v1637
    %v1655 = vsel %vm1653, %v1643, 2102212464
    %v1656 = vsel %vm1652, %v1640, %v1655
    %v1657 = vsel %vm1651, %v1654, %v1656
    %v1658 = vsel %vm1650, %v1637, %v1640
    %v1659 = vsel %vm1653, %v1646, 920167782
    %v1660 = vsel %vm1652, %v1643, %v1659
    %v1661 = vsel %vm1651, %v1658, %v1660
    %v1662 = vsel %vm1650, %v1640, %v1643
    %v1663 = vsel %vm1653, %v1649, 1326507024
    %v1664 = vsel %vm1652, %v1646, %v1663
    %v1665 = vsel %vm1651, %v1662, %v1664
    %v1666 = vshll.u32 %v1626, 8
    %v1667 = vmul.u32.u64.compose %v1666, %v1665
    %v1668 = vextract.low.u32 %v1667
    %v1669 = vextract.high.u32 %v1667
    %v1670 = vmul.u32.u64.compose %v1666, %v1661
    %v1671 = vextract.low.u32 %v1670
    %v1672 = vextract.high.u32 %v1670
    %v1673 = vmul.u32 %v1666, %v1657
    %v1674 = vadd.s32 %v1669, %v1671
    %vm1675 = vc.u32 %v1669, %v1671
    %v1676 = vadd.s32 %v1672, 1
    %v1677 = vsel %vm1675, %v1676, %v1672
    %v1678 = vadd.s32 %v1673, %v1677
    %v1679 = vadd.s32 %v1678, 536870912
    %v1680 = vshrl.u32 %v1679, 30
    %v1681 = vshll.u32 %v1680, 30
    %v1682 = vsub.s32 %v1678, %v1681
    %vm1683 = vcmp.lt.s32.totalorder %v1682, 0
    %v1684 = vsub.s32 0, %v1682
    %v1685 = vsel %vm1683, %v1684, %v1682
    %v1686 = vclz %v1685
    %v1687 = vsub.s32 %v1686, 2
    %vm1688 = vcmp.gt.s32.totalorder 0, %v1687
    %v1689 = vsel %vm1688, 0, %v1687
    %v1690 = vsub.s32 32, %v1689
    %v1691 = vshll.u32 %v1682, %v1689
    %v1692 = vshrl.u32 %v1674, %v1690
    %v1693 = vor.u32 %v1691, %v1692
    %v1694 = vsub.s32 4294967266, %v1689
    %v1695 = vadd.s32 %v1694, 127
    %v1696 = vshll.u32 %v1695, 23
    %v1697 = vor.u32 4788187, %v1696
    %v1698 = vand.u32 2147483647, %v1697
    %v1700 = vcvt.s32.f32 %v1693
    %v1701 = vmul.f32 %v1700, %v1698
    %v1702 = vxor.u32 %v1701, 2147483648
    %v1703 = vsel %vm1620, %v1702, %v1701
    %v1704 = vsub.s32 4, %v1680
    %v1705 = vsel %vm1620, %v1704, %v1680
    %v1706 = vsel %vm1619, %v263, %v1703
    %v1707 = vsel %vm1619, 0, %v1705
    %v1708 = vcosq.f32.pop %v1706
    %v1709 = vsinq.f32.pop %v1706
    %vm1710 = vweird.f32 %v263
    %v1711 = vadd.s32 %v1707, 3
    %v1712 = vand.u32 %v1711, 3
    %vm1713 = vcmp.lt.s32.totalorder %v1712, 2
    %vm1714 = vcmp.eq.s32.totalorder %v1712, 0
    %v1715 = vxor.u32 %v1709, 2147483648
    %v1716 = vsel %vm1714, %v1708, %v1715
    %vm1717 = vcmp.eq.s32.totalorder %v1712, 2
    %v1718 = vxor.u32 %v1708, 2147483648
    %v1719 = vsel %vm1717, %v1718, %v1709
    %v1720 = vsel %vm1713, %v1716, %v1719
    %v1721 = vsel %vm1710, nan, %v1720
    %v1722 = vand.u32 2147483647, %v264
    %vm1723 = vcmp.le.f32.partialorder %v1722, 0.7853982
    %vm1724 = vcmp.lt.s32.totalorder %v264, 0
    %v1725 = vand.u32 %v264, 2139095040
    %v1726 = vshrl.u32 %v1725, 23
    %v1727 = vsub.s32 %v1726, 127
    %v1728 = vand.u32 2147483647, %v264
    %v1729 = vand.u32 %v1728, 8388607
    %v1730 = vor.u32 %v1729, 8388608
    %v1731 = vsub.s32 0, %v1730
    %v1732 = vadd.s32 %v1727, 1
    %vm1733 = vcmp.gt.s32.totalorder %v1732, 0
    %v1734 = vsel %vm1733, %v1732, 0
    %v1735 = vshrl.u32 %v1734, 5
    %v1736 = vand.u32 %v1734, 31
    %v1737 = vsub.s32 32, %v1736
    %v1738 = vshrl.u32 683565275, %v1737
    %v1739 = vshll.u32 683565275, %v1736
    %v1740 = vshrl.u32 2475754826, %v1737
    %v1741 = vor.u32 %v1739, %v1740
    %v1742 = vshll.u32 2475754826, %v1736
    %v1743 = vshrl.u32 2131351028, %v1737
    %v1744 = vor.u32 %v1742, %v1743
    %v1745 = vshll.u32 2131351028, %v1736
    %v1746 = vshrl.u32 2102212464, %v1737
    %v1747 = vor.u32 %v1745, %v1746
    %v1748 = vshll.u32 2102212464, %v1736
    %v1749 = vshrl.u32 920167782, %v1737
    %v1750 = vor.u32 %v1748, %v1749
    %v1751 = vshll.u32 920167782, %v1736
    %v1752 = vshrl.u32 1326507024, %v1737
    %v1753 = vor.u32 %v1751, %v1752
    %vm1754 = vcmp.lt.s32.totalorder %v1735, 1
    %vm1755 = vcmp.lt.s32.totalorder %v1735, 2
    %vm1756 = vcmp.lt.s32.totalorder %v1735, 3
    %vm1757 = vcmp.lt.s32.totalorder %v1735, 4
    %v1758 = vsel %vm1754, %v1738, %v1741
    %v1759 = vsel %vm1757, %v1747, 2102212464
    %v1760 = vsel %vm1756, %v1744, %v1759
    %v1761 = vsel %vm1755, %v1758, %v1760
    %v1762 = vsel %vm1754, %v1741, %v1744
    %v1763 = vsel %vm1757, %v1750, 920167782
    %v1764 = vsel %vm1756, %v1747, %v1763
    %v1765 = vsel %vm1755, %v1762, %v1764
    %v1766 = vsel %vm1754, %v1744, %v1747
    %v1767 = vsel %vm1757, %v1753, 1326507024
    %v1768 = vsel %vm1756, %v1750, %v1767
    %v1769 = vsel %vm1755, %v1766, %v1768
    %v1770 = vshll.u32 %v1730, 8
    %v1771 = vmul.u32.u64.compose %v1770, %v1769
    %v1772 = vextract.low.u32 %v1771
    %v1773 = vextract.high.u32 %v1771
    %v1774 = vmul.u32.u64.compose %v1770, %v1765
    %v1775 = vextract.low.u32 %v1774
    %v1776 = vextract.high.u32 %v1774
    %v1777 = vmul.u32 %v1770, %v1761
    %v1778 = vadd.s32 %v1773, %v1775
    %vm1779 = vc.u32 %v1773, %v1775
    %v1780 = vadd.s32 %v1776, 1
    %v1781 = vsel %vm1779, %v1780, %v1776
    %v1782 = vadd.s32 %v1777, %v1781
    %v1783 = vadd.s32 %v1782, 536870912
    %v1784 = vshrl.u32 %v1783, 30
    %v1785 = vshll.u32 %v1784, 30
    %v1786 = vsub.s32 %v1782, %v1785
    %vm1787 = vcmp.lt.s32.totalorder %v1786, 0
    %v1788 = vsub.s32 0, %v1786
    %v1789 = vsel %vm1787, %v1788, %v1786
    %v1790 = vclz %v1789
    %v1791 = vsub.s32 %v1790, 2
    %vm1792 = vcmp.gt.s32.totalorder 0, %v1791
    %v1793 = vsel %vm1792, 0, %v1791
    %v1794 = vsub.s32 32, %v1793
    %v1795 = vshll.u32 %v1786, %v1793
    %v1796 = vshrl.u32 %v1778, %v1794
    %v1797 = vor.u32 %v1795, %v1796
    %v1798 = vsub.s32 4294967266, %v1793
    %v1799 = vadd.s32 %v1798, 127
    %v1800 = vshll.u32 %v1799, 23
    %v1801 = vor.u32 4788187, %v1800
    %v1802 = vand.u32 2147483647, %v1801
    %v1804 = vcvt.s32.f32 %v1797
    %v1805 = vmul.f32 %v1804, %v1802
    %v1806 = vxor.u32 %v1805, 2147483648
    %v1807 = vsel %vm1724, %v1806, %v1805
    %v1808 = vsub.s32 4, %v1784
    %v1809 = vsel %vm1724, %v1808, %v1784
    %v1810 = vsel %vm1723, %v264, %v1807
    %v1811 = vsel %vm1723, 0, %v1809
    %v1812 = vcosq.f32.pop %v1810
    %v1813 = vsinq.f32.pop %v1810
    %vm1814 = vweird.f32 %v264
    %v1815 = vadd.s32 %v1811, 3
    %v1816 = vand.u32 %v1815, 3
    %vm1817 = vcmp.lt.s32.totalorder %v1816, 2
    %vm1818 = vcmp.eq.s32.totalorder %v1816, 0
    %v1819 = vxor.u32 %v1813, 2147483648
    %v1820 = vsel %vm1818, %v1812, %v1819
    %vm1821 = vcmp.eq.s32.totalorder %v1816, 2
    %v1822 = vxor.u32 %v1812, 2147483648
    %v1823 = vsel %vm1821, %v1822, %v1813
    %v1824 = vsel %vm1817, %v1820, %v1823
    %v1825 = vsel %vm1814, nan, %v1824
    %v1826 = vand.u32 2147483647, %v265
    %vm1827 = vcmp.le.f32.partialorder %v1826, 0.7853982
    %vm1828 = vcmp.lt.s32.totalorder %v265, 0
    %v1829 = vand.u32 %v265, 2139095040
    %v1830 = vshrl.u32 %v1829, 23
    %v1831 = vsub.s32 %v1830, 127
    %v1832 = vand.u32 2147483647, %v265
    %v1833 = vand.u32 %v1832, 8388607
    %v1834 = vor.u32 %v1833, 8388608
    %v1835 = vsub.s32 0, %v1834
    %v1836 = vadd.s32 %v1831, 1
    %vm1837 = vcmp.gt.s32.totalorder %v1836, 0
    %v1838 = vsel %vm1837, %v1836, 0
    %v1839 = vshrl.u32 %v1838, 5
    %v1840 = vand.u32 %v1838, 31
    %v1841 = vsub.s32 32, %v1840
    %v1842 = vshrl.u32 683565275, %v1841
    %v1843 = vshll.u32 683565275, %v1840
    %v1844 = vshrl.u32 2475754826, %v1841
    %v1845 = vor.u32 %v1843, %v1844
    %v1846 = vshll.u32 2475754826, %v1840
    %v1847 = vshrl.u32 2131351028, %v1841
    %v1848 = vor.u32 %v1846, %v1847
    %v1849 = vshll.u32 2131351028, %v1840
    %v1850 = vshrl.u32 2102212464, %v1841
    %v1851 = vor.u32 %v1849, %v1850
    %v1852 = vshll.u32 2102212464, %v1840
    %v1853 = vshrl.u32 920167782, %v1841
    %v1854 = vor.u32 %v1852, %v1853
    %v1855 = vshll.u32 920167782, %v1840
    %v1856 = vshrl.u32 1326507024, %v1841
    %v1857 = vor.u32 %v1855, %v1856
    %vm1858 = vcmp.lt.s32.totalorder %v1839, 1
    %vm1859 = vcmp.lt.s32.totalorder %v1839, 2
    %vm1860 = vcmp.lt.s32.totalorder %v1839, 3
    %vm1861 = vcmp.lt.s32.totalorder %v1839, 4
    %v1862 = vsel %vm1858, %v1842, %v1845
    %v1863 = vsel %vm1861, %v1851, 2102212464
    %v1864 = vsel %vm1860, %v1848, %v1863
    %v1865 = vsel %vm1859, %v1862, %v1864
    %v1866 = vsel %vm1858, %v1845, %v1848
    %v1867 = vsel %vm1861, %v1854, 920167782
    %v1868 = vsel %vm1860, %v1851, %v1867
    %v1869 = vsel %vm1859, %v1866, %v1868
    %v1870 = vsel %vm1858, %v1848, %v1851
    %v1871 = vsel %vm1861, %v1857, 1326507024
    %v1872 = vsel %vm1860, %v1854, %v1871
    %v1873 = vsel %vm1859, %v1870, %v1872
    %v1874 = vshll.u32 %v1834, 8
    %v1875 = vmul.u32.u64.compose %v1874, %v1873
    %v1876 = vextract.low.u32 %v1875
    %v1877 = vextract.high.u32 %v1875
    %v1878 = vmul.u32.u64.compose %v1874, %v1869
    %v1879 = vextract.low.u32 %v1878
    %v1880 = vextract.high.u32 %v1878
    %v1881 = vmul.u32 %v1874, %v1865
    %v1882 = vadd.s32 %v1877, %v1879
    %vm1883 = vc.u32 %v1877, %v1879
    %v1884 = vadd.s32 %v1880, 1
    %v1885 = vsel %vm1883, %v1884, %v1880
    %v1886 = vadd.s32 %v1881, %v1885
    %v1887 = vadd.s32 %v1886, 536870912
    %v1888 = vshrl.u32 %v1887, 30
    %v1889 = vshll.u32 %v1888, 30
    %v1890 = vsub.s32 %v1886, %v1889
    %vm1891 = vcmp.lt.s32.totalorder %v1890, 0
    %v1892 = vsub.s32 0, %v1890
    %v1893 = vsel %vm1891, %v1892, %v1890
    %v1894 = vclz %v1893
    %v1895 = vsub.s32 %v1894, 2
    %vm1896 = vcmp.gt.s32.totalorder 0, %v1895
    %v1897 = vsel %vm1896, 0, %v1895
    %v1898 = vsub.s32 32, %v1897
    %v1899 = vshll.u32 %v1890, %v1897
    %v1900 = vshrl.u32 %v1882, %v1898
    %v1901 = vor.u32 %v1899, %v1900
    %v1902 = vsub.s32 4294967266, %v1897
    %v1903 = vadd.s32 %v1902, 127
    %v1904 = vshll.u32 %v1903, 23
    %v1905 = vor.u32 4788187, %v1904
    %v1906 = vand.u32 2147483647, %v1905
    %v1908 = vcvt.s32.f32 %v1901
    %v1909 = vmul.f32 %v1908, %v1906
    %v1910 = vxor.u32 %v1909, 2147483648
    %v1911 = vsel %vm1828, %v1910, %v1909
    %v1912 = vsub.s32 4, %v1888
    %v1913 = vsel %vm1828, %v1912, %v1888
    %v1914 = vsel %vm1827, %v265, %v1911
    %v1915 = vsel %vm1827, 0, %v1913
    %v1916 = vcosq.f32.pop %v1914
    %v1917 = vsinq.f32.pop %v1914
    %vm1918 = vweird.f32 %v265
    %v1919 = vadd.s32 %v1915, 3
    %v1920 = vand.u32 %v1919, 3
    %vm1921 = vcmp.lt.s32.totalorder %v1920, 2
    %vm1922 = vcmp.eq.s32.totalorder %v1920, 0
    %v1923 = vxor.u32 %v1917, 2147483648
    %v1924 = vsel %vm1922, %v1916, %v1923
    %vm1925 = vcmp.eq.s32.totalorder %v1920, 2
    %v1926 = vxor.u32 %v1916, 2147483648
    %v1927 = vsel %vm1925, %v1926, %v1917
    %v1928 = vsel %vm1921, %v1924, %v1927
    %v1929 = vsel %vm1918, nan, %v1928
    %v1930 = vmul.f32 %v208, %v1201
    %v1931 = vmul.f32 %v215, %v1305
    %v1932 = vmul.f32 %v222, %v1409
    %v1933 = vmul.f32 %v229, %v1513
    %v1934 = vmul.f32 %v236, %v1617
    %v1935 = vmul.f32 %v243, %v1721
    %v1936 = vmul.f32 %v250, %v1825
    %v1937 = vmul.f32 %v257, %v1929
    %v1946 = vrot.slane %v1930, 4
    %v1947 = vrot.slane %v1931, 4
    %v1948 = vrot.slane %v1932, 4
    %v1949 = vrot.slane %v1933, 4
    %v1950 = vrot.slane %v1934, 4
    %v1951 = vrot.slane %v1935, 4
    %v1952 = vrot.slane %v1936, 4
    %v1953 = vrot.slane %v1937, 4
    %vm1962 = vcmask 1043456
    %v1963 = vsel %vm1962, %v1090, %v1946
    %v1964 = vsel %vm1962, %v1091, %v1947
    %v1965 = vsel %vm1962, %v1092, %v1948
    %v1966 = vsel %vm1962, %v1093, %v1949
    %v1967 = vsel %vm1962, %v1094, %v1950
    %v1968 = vsel %vm1962, %v1095, %v1951
    %v1969 = vsel %vm1962, %v1096, %v1952
    %v1970 = vsel %vm1962, %v1097, %v1953
    %v1971 = vadd.f32 %v1963, 0.0
    %v1972 = vadd.f32 %v1964, 0.0
    %v1973 = vadd.f32 %v1965, 0.0
    %v1974 = vadd.f32 %v1966, 0.0
    %v1975 = vadd.f32 %v1967, 0.0
    %v1976 = vadd.f32 %v1968, 0.0
    %v1977 = vadd.f32 %v1969, 0.0
    %v1978 = vadd.f32 %v1970, 0.0
    %v1979 = vld [vmem:[#allocation3] sm:$0xff]
    %v1980 = vld [vmem:[#allocation3 + $0x8] sm:$0xff]
    %v1981 = vld [vmem:[#allocation3 + $0x10] sm:$0xff]
    %v1982 = vld [vmem:[#allocation3 + $0x18] sm:$0xff]
    %v1983 = vld [vmem:[#allocation3 + $0x20] sm:$0xff]
    %v1984 = vld [vmem:[#allocation3 + $0x28] sm:$0xff]
    %v1985 = vld [vmem:[#allocation3 + $0x30] sm:$0xff]
    %v1986 = vld [vmem:[#allocation3 + $0x38] sm:$0xff]
    %v1987 = vadd.f32 %v1979, %v1971
    %v1988 = vadd.f32 %v1980, %v1972
    %v1989 = vadd.f32 %v1981, %v1973
    %v1990 = vadd.f32 %v1982, %v1974
    %v1991 = vadd.f32 %v1983, %v1975
    %v1992 = vadd.f32 %v1984, %v1976
    %v1993 = vadd.f32 %v1985, %v1977
    %v1994 = vadd.f32 %v1986, %v1978
    %1995 = vst [vmem:[#allocation6] sm:$0xff] %v1987
    %1996 = vst [vmem:[#allocation6 + $0x8] sm:$0xff] %v1988
    %1997 = vst [vmem:[#allocation6 + $0x10] sm:$0xff] %v1989
    %1998 = vst [vmem:[#allocation6 + $0x18] sm:$0xff] %v1990
    %1999 = vst [vmem:[#allocation6 + $0x20] sm:$0xff] %v1991
    %2000 = vst [vmem:[#allocation6 + $0x28] sm:$0xff] %v1992
    %2001 = vst [vmem:[#allocation6 + $0x30] sm:$0xff] %v1993
    %2002 = vst [vmem:[#allocation6 + $0x38] sm:$0xff] %v1994
    // Predicated region
    $region14: #{tpu_custom_call.1} parent=1 // pred_check
      _
    $region15: #{tpu_custom_call.1} parent=1 // pred_check_branch
      %2004 = sbr.rel (0) target = $region17
    $region16: #{tpu_custom_call.1} parent=1 // pred_region
      %s2006 = ssub.s32 1024, 1024
      %2007 = vsyncadd [#allocation5], %s2006
      %s2009 = sshll.u32 [#allocation6], 4
      %s2010 = int_to_ptr.vmem [resolvable:$true] %s2009
      %2012 = dma.vmem_to_hbm [thread:$0]  %s2010, 1024, %s2, [#allocation5]
    $region17: #{tpu_custom_call.1} parent=1 // pred_fallthru
      _
    // Predicated region
    $region18: #{tpu_custom_call.1} parent=1 // pred_check
      _
    $region19: #{tpu_custom_call.1} parent=1 // pred_check_branch
      %2014 = sbr.rel (0) target = $region21
    $region20: #{tpu_custom_call.1} parent=1 // pred_region
      %2015 = dma.done [#allocation5], 1024
    $region21: #{tpu_custom_call.1} parent=1 // pred_fallthru
      _
    %2016 = vsyncpa [#allocation4], 1
    %2017 = vsyncpa [#allocation5], 1

</llo_original>
